<compile_context>
chip_gen: v7x
topology: tpu7x:2x2x1
jax: 0.10.0
libtpu: 0.0.40
codegen_flags: <defaults>
</compile_context>

<pallas_src>
import functools
import math

import jax
import jax.numpy as jnp
from jax.experimental import pallas as pl
from jax.experimental.pallas import tpu as pltpu


_LANE = 128
# Largest spatial (lane) tile. Per-step VMEM ~ 2*(Cin*TILE*2B + Cin*HALO*2B + C*TILE*4B)
# + weights; 1024 lanes stays well inside the 32 MiB default scoped VMEM on v5e/v6e.
# Halve this on v7x (64 MiB physical VMEM) for large Cin/C.
_MAX_TILE_LANES = 1024


def _round_up(x, m):
    return ((x + m - 1) // m) * m


# --------------------------------------------------------------------------- SE kernel
def _make_se_kernel(K, C, inv_sqrt_hidden):
    def kernel(pooled_ref, w1t_ref, w2t_ref, b2_ref, prob_ref):
        # pooled_ref: (B, Cin)       global-average-pooled input (f32)
        # w1t_ref:    (Cin, hidden)  fc1 weight, transposed
        # w2t_ref:    (hidden, K*C)  fc2 weight, transposed
        # b2_ref:     (1, K*C)       fc2 bias
        # prob_ref:   (B, K*C)       softmax over K (columns ordered k*C + c), lane-dense
        h = jnp.dot(pooled_ref[...], w1t_ref[...], preferred_element_type=jnp.float32)
        h = jnp.maximum(h, 0.0)                                        # ReLU, (B, hidden)
        s = jnp.dot(h, w2t_ref[...], preferred_element_type=jnp.float32) + b2_ref[...]
        s = s * inv_sqrt_hidden                                        # (B, K*C)

        # softmax over the K experts (each expert is a contiguous C-lane chunk).
        chunks = [s[:, kk * C:(kk + 1) * C] for kk in range(K)]
        m = chunks[0]
        for ck in chunks[1:]:
            m = jnp.maximum(m, ck)
        exps = [jnp.exp(ck - m) for ck in chunks]
        den = exps[0]
        for e in exps[1:]:
            den = den + e
        inv_den = pl.reciprocal(den, approx=True)                      # EUP, ~free slot
        prob_ref[...] = jnp.concatenate([e * inv_den for e in exps], axis=1)

    return kernel


# ----------------------------------------------------- conv kernel (shifted-slice matmuls)
def _make_conv_kernel(offs, tile_l):
    def kernel(xlo_ref, xhi_ref, w_ref, out_ref):
        # xlo_ref: (1, Cin, tile_l)       bf16, current spatial tile of padded+flattened x
        # xhi_ref: (1, Cin, halo_lanes)   bf16, lanes immediately after the tile (halo)
        # w_ref:   (1, T, C, Cin)         bf16, expert-folded per-batch weight, T=kh*kw taps
        # out_ref: (1, C, tile_l)         f32
        # Single aligned lane-concat (tile_l is a 128-multiple), then T static slices.
        window = jnp.concatenate([xlo_ref[0], xhi_ref[0]], axis=1)     # (Cin, tile_l+halo)
        acc = jnp.dot(w_ref[0, 0], window[:, offs[0]:offs[0] + tile_l],
                      preferred_element_type=jnp.float32)
        for j in range(1, len(offs)):
            off = offs[j]
            acc = acc + jnp.dot(w_ref[0, j], window[:, off:off + tile_l],
                                preferred_element_type=jnp.float32)
        out_ref[0] = acc

    return kernel


# ----------------------------------------------------------------------------- host glue
def dyc_conv2d(x, weight, fc1_w, fc2_w, fc2_b, *, K, out_channels,
               ksize, stride=1, padding=0, dilation=1):
    # TODO(synk): stride > 1 not implemented (module default / demo uses stride=1).
    assert stride == 1, "only stride == 1 is implemented"
    B, Cin, H, W = x.shape
    C = out_channels
    hidden = fc1_w.shape[0]
    Hp, Wp = H + 2 * padding, W + 2 * padding
    Ho = Hp - dilation * (ksize - 1)
    Wo = Wp - dilation * (ksize - 1)
    T = ksize * ksize

    # ---- SE attention: prob (B, K*C) = softmax_K(fc2(relu(fc1(avgpool(x)))) / sqrt(h)) ----
    pooled = jnp.mean(x, axis=(2, 3)).astype(jnp.float32)              # AdaptiveAvgPool2d(1)
    prob = pl.pallas_call(
        _make_se_kernel(K, C, 1.0 / math.sqrt(hidden)),
        out_shape=jax.ShapeDtypeStruct((B, K * C), jnp.float32),
    )(pooled, fc1_w.T, fc2_w.T, fc2_b.reshape(1, K * C))

    # ---- fold the K experts into per-batch effective weights (tiny, done once in XLA) ----
    w_taps = weight.reshape(K, C, Cin, ksize, ksize)
    w_taps = w_taps.transpose(0, 3, 4, 1, 2).reshape(K, T, C, Cin)     # (K, tap, C, Cin)
    w_eff = jnp.einsum("bkc,ktci->btci", prob.reshape(B, K, C), w_taps)
    w_eff = w_eff.astype(jnp.bfloat16)                                 # (B, T, C, Cin)

    # ---- conv: per-tap accumulating matmuls over shifted slices of padded, flattened x ----
    L = Ho * Wp                                      # compute columns (Wp-wide rows, stride 1)
    halo = (ksize - 1) * dilation * (Wp + 1)         # max flattened tap offset
    halo_lanes = _round_up(max(halo, 1), _LANE)
    tile_l = _round_up(min(_round_up(L, _LANE), _MAX_TILE_LANES), halo_lanes)
    halo_step = tile_l // halo_lanes                 # exact by construction
    n_t = pl.cdiv(L, tile_l)
    P = n_t * tile_l + halo_lanes

    x_flat = jnp.pad(x, ((0, 0), (0, 0), (padding, padding), (padding, padding)))
    x_flat = x_flat.reshape(B, Cin, Hp * Wp)
    x_flat = jnp.pad(x_flat, ((0, 0), (0, 0), (0, P - Hp * Wp))).astype(jnp.bfloat16)

    offs = tuple(kh * dilation * Wp + kw * dilation
                 for kh in range(ksize) for kw in range(ksize))

    out_flat = pl.pallas_call(
        _make_conv_kernel(offs, tile_l),
        out_shape=jax.ShapeDtypeStruct((B, C, n_t * tile_l), jnp.float32),
        grid=(B, n_t),
        in_specs=[
            pl.BlockSpec((1, Cin, tile_l), lambda b, t: (b, 0, t)),
            pl.BlockSpec((1, Cin, halo_lanes),
                         lambda b, t: (b, 0, (t + 1) * halo_step)),
            # Same block index for every t -> weight block stays resident across spatial tiles.
            pl.BlockSpec((1, T, C, Cin), lambda b, t: (b, 0, 0, 0)),
        ],
        out_specs=pl.BlockSpec((1, C, tile_l), lambda b, t: (b, 0, t)),
        compiler_params=pltpu.CompilerParams(
            dimension_semantics=("parallel", "parallel")),
    )(x_flat, x_flat, w_eff)

    # valid output columns are i = ho*Wp + wo with wo < Wo
    out = out_flat[:, :, :L].reshape(B, C, Ho, Wp)[:, :, :, :Wo]
    return out


# ----------------------------------------------------------------------- pure-JAX reference
def dyc_conv2d_reference(x, weight, fc1_w, fc2_w, fc2_b, *, K, out_channels,
                         ksize, stride=1, padding=0, dilation=1):
    B, Cin, H, W = x.shape
    C = out_channels
    hidden = fc1_w.shape[0]
    pooled = jnp.mean(x, axis=(2, 3))                                    # (B, Cin)
    h = jnp.maximum(pooled @ fc1_w.T, 0.0)
    s = h @ fc2_w.T + fc2_b                                              # (B, K*C)
    prob = jax.nn.softmax(s.reshape(B, K, C) / math.sqrt(hidden), axis=1)
    out = jax.lax.conv_general_dilated(
        x, weight, window_strides=(stride, stride),
        padding=[(padding, padding), (padding, padding)],
        rhs_dilation=(dilation, dilation),
        dimension_numbers=("NCHW", "OIHW", "NCHW"),
        precision=jax.lax.Precision.HIGHEST)                             # (B, K*C, Ho, Wo)
    Ho, Wo = out.shape[2], out.shape[3]
    out = out.reshape(B, K, C, Ho * Wo)
    out = jnp.sum(prob[..., None] * out, axis=1)
    return out.reshape(B, C, Ho, Wo)


if __name__ == "__main__":
    # Module config (matches DyC_Conv2d defaults: groups=1, bias=False, ratio=1, K=4).
    B, Cin, H, W = 2, 4, 16, 16
    C_out, ksize, stride, padding, dilation = 8, 3, 1, 1, 1
    K, ratio = 4, 1
    hidden = int(Cin * ratio) + 1

    key = jax.random.PRNGKey(0)
    k_w, k_fc1, k_fc2, k_x = jax.random.split(key, 4)

    gain = math.sqrt(2.0)                                   # calculate_gain('relu')
    he_std = gain * (Cin * ksize ** 2) ** (-0.5)
    weight = jax.random.normal(k_w, (K * C_out, Cin, ksize, ksize), jnp.float32) * he_std
    # fc1/fc2: kaiming_normal_(mode='fan_out', relu); biases zero.
    fc1_w = jax.random.normal(k_fc1, (hidden, Cin), jnp.float32) * (gain / math.sqrt(hidden))
    fc2_w = jax.random.normal(k_fc2, (K * C_out, hidden), jnp.float32) * (gain / math.sqrt(K * C_out))
    fc2_b = jnp.zeros((K * C_out,), jnp.float32)

    x = jax.random.normal(k_x, (B, Cin, H, W), jnp.float32)

    fn = jax.jit(functools.partial(dyc_conv2d, K=K, out_channels=C_out, ksize=ksize,
                                   stride=stride, padding=padding, dilation=dilation))
    out = jax.block_until_ready(fn(x, weight, fc1_w, fc2_w, fc2_b))

    ref = dyc_conv2d_reference(x, weight, fc1_w, fc2_w, fc2_b,
                               K=K, out_channels=C_out, ksize=ksize,
                               stride=stride, padding=padding, dilation=dilation)
    ref = jax.block_until_ready(ref)

    assert out.shape == (B, C_out, H, W), out.shape
    assert bool(jnp.all(jnp.isfinite(out)))
    max_err = float(jnp.max(jnp.abs(out - ref)))
    assert max_err < 2e-2, f"mismatch vs reference: {max_err}"

    print("KERNEL_OK")
</pallas_src>

<mosaic_0001>
module attributes {stable_mosaic.version = 11 : i64} {
  func.func @kernel(%arg0: memref<2x4xf32, #tpu.memory_space<vmem>>, %arg1: memref<4x5xf32, #tpu.memory_space<vmem>>, %arg2: memref<5x32xf32, #tpu.memory_space<vmem>>, %arg3: memref<1x32xf32, #tpu.memory_space<vmem>>, %arg4: memref<2x32xf32, #tpu.memory_space<vmem>>) attributes {dimension_semantics = [], scalar_prefetch = 0 : i64, scratch_operands = 0 : i64, tpu.core_type = #tpu.core_type<tc>} {
    %c0 = arith.constant 0 : index
    %c0_0 = arith.constant 0 : index
    %0 = vector.load %arg0[%c0, %c0_0] : memref<2x4xf32, #tpu.memory_space<vmem>>, vector<2x4xf32>
    %c0_1 = arith.constant 0 : index
    %c0_2 = arith.constant 0 : index
    %1 = vector.load %arg1[%c0_1, %c0_2] : memref<4x5xf32, #tpu.memory_space<vmem>>, vector<4x5xf32>
    %cst = arith.constant dense<0.000000e+00> : vector<2x5xf32>
    %2 = tpu.matmul %0, %1, %cst {dimension_numbers = #tpu.dot_dimension_numbers<[1], [0], [0], [1], [0, 0, 1, 1], [], []>} : vector<2x4xf32>, vector<4x5xf32>, vector<2x5xf32> -> vector<2x5xf32>
    %cst_3 = arith.constant 0.000000e+00 : f32
    %3 = vector.broadcast %cst_3 : f32 to vector<2x5xf32>
    %4 = arith.maximumf %2, %3 : vector<2x5xf32>
    %c0_4 = arith.constant 0 : index
    %c0_5 = arith.constant 0 : index
    %5 = vector.load %arg2[%c0_4, %c0_5] : memref<5x32xf32, #tpu.memory_space<vmem>>, vector<5x32xf32>
    %cst_6 = arith.constant dense<0.000000e+00> : vector<2x32xf32>
    %6 = tpu.matmul %4, %5, %cst_6 {dimension_numbers = #tpu.dot_dimension_numbers<[1], [0], [0], [1], [0, 0, 1, 1], [], []>} : vector<2x5xf32>, vector<5x32xf32>, vector<2x32xf32> -> vector<2x32xf32>
    %c0_7 = arith.constant 0 : index
    %c0_8 = arith.constant 0 : index
    %7 = vector.load %arg3[%c0_7, %c0_8] : memref<1x32xf32, #tpu.memory_space<vmem>>, vector<1x32xf32>
    %8 = vector.broadcast %7 : vector<1x32xf32> to vector<2x32xf32>
    %9 = arith.addf %6, %8 : vector<2x32xf32>
    %cst_9 = arith.constant 0.44721359 : f32
    %10 = vector.broadcast %cst_9 : f32 to vector<2x32xf32>
    %11 = arith.mulf %9, %10 : vector<2x32xf32>
    %12 = vector.extract_strided_slice %11 {offsets = [0, 0], sizes = [2, 8], strides = [1, 1]} : vector<2x32xf32> to vector<2x8xf32>
    %13 = vector.extract_strided_slice %11 {offsets = [0, 8], sizes = [2, 8], strides = [1, 1]} : vector<2x32xf32> to vector<2x8xf32>
    %14 = vector.extract_strided_slice %11 {offsets = [0, 16], sizes = [2, 8], strides = [1, 1]} : vector<2x32xf32> to vector<2x8xf32>
    %15 = vector.extract_strided_slice %11 {offsets = [0, 24], sizes = [2, 8], strides = [1, 1]} : vector<2x32xf32> to vector<2x8xf32>
    %16 = arith.maximumf %12, %13 : vector<2x8xf32>
    %17 = arith.maximumf %16, %14 : vector<2x8xf32>
    %18 = arith.maximumf %17, %15 : vector<2x8xf32>
    %19 = arith.subf %12, %18 : vector<2x8xf32>
    %20 = math.exp %19 : vector<2x8xf32>
    %21 = arith.subf %13, %18 : vector<2x8xf32>
    %22 = math.exp %21 : vector<2x8xf32>
    %23 = arith.subf %14, %18 : vector<2x8xf32>
    %24 = math.exp %23 : vector<2x8xf32>
    %25 = arith.subf %15, %18 : vector<2x8xf32>
    %26 = math.exp %25 : vector<2x8xf32>
    %27 = arith.addf %20, %22 : vector<2x8xf32>
    %28 = arith.addf %27, %24 : vector<2x8xf32>
    %29 = arith.addf %28, %26 : vector<2x8xf32>
    %30 = tpu.reciprocal %29 {approx = true} : vector<2x8xf32> -> vector<2x8xf32>
    %31 = arith.mulf %20, %30 : vector<2x8xf32>
    %32 = arith.mulf %22, %30 : vector<2x8xf32>
    %33 = arith.mulf %24, %30 : vector<2x8xf32>
    %34 = arith.mulf %26, %30 : vector<2x8xf32>
    %35 = tpu.concatenate %31, %32, %33, %34 in 1 : vector<2x8xf32>, vector<2x8xf32>, vector<2x8xf32>, vector<2x8xf32> -> vector<2x32xf32>
    %c0_10 = arith.constant 0 : index
    %c0_11 = arith.constant 0 : index
    %36 = vector.load %arg4[%c0_10, %c0_11] : memref<2x32xf32, #tpu.memory_space<vmem>>, vector<2x32xf32>
    tpu.vector_store %arg4[%c0_10, %c0_11], %35 {strides = array<i32>} : memref<2x32xf32, #tpu.memory_space<vmem>>, vector<2x32xf32>,
    return
  }
}

module attributes {stable_mosaic.version = 11 : i64} {
  func.func @kernel(%arg0: i32, %arg1: i32, %arg2: memref<1x4x384xbf16, #tpu.memory_space<vmem>>, %arg3: memref<1x4x128xbf16, #tpu.memory_space<vmem>>, %arg4: memref<1x9x8x4xbf16, #tpu.memory_space<vmem>>, %arg5: memref<1x8x384xf32, #tpu.memory_space<vmem>>) attributes {dimension_semantics = [#tpu.dimension_semantics<parallel>, #tpu.dimension_semantics<parallel>], iteration_bounds = array<i64: 2, 1>, scalar_prefetch = 0 : i64, scratch_operands = 0 : i64, tpu.core_type = #tpu.core_type<tc>, window_params = [{transform_indices = @transform_0, window_bounds = array<i64: 1, 4, 384>}, {transform_indices = @transform_1, window_bounds = array<i64: 1, 4, 128>}, {transform_indices = @transform_2, window_bounds = array<i64: 1, 9, 8, 4>}, {transform_indices = @transform_3, window_bounds = array<i64: 1, 8, 384>}]} {
    %c0 = arith.constant 0 : index
    %c0_0 = arith.constant 0 : index
    %c0_1 = arith.constant 0 : index
    %0 = vector.load %arg2[%c0, %c0_0, %c0_1] : memref<1x4x384xbf16, #tpu.memory_space<vmem>>, vector<1x4x384xbf16>
    %1 = vector.shape_cast %0 : vector<1x4x384xbf16> to vector<4x384xbf16>
    %c0_2 = arith.constant 0 : index
    %c0_3 = arith.constant 0 : index
    %c0_4 = arith.constant 0 : index
    %2 = vector.load %arg3[%c0_2, %c0_3, %c0_4] : memref<1x4x128xbf16, #tpu.memory_space<vmem>>, vector<1x4x128xbf16>
    %3 = vector.shape_cast %2 : vector<1x4x128xbf16> to vector<4x128xbf16>
    %4 = tpu.concatenate %1, %3 in 1 : vector<4x384xbf16>, vector<4x128xbf16> -> vector<4x512xbf16>
    %c0_5 = arith.constant 0 : index
    %c0_6 = arith.constant 0 : index
    %c0_7 = arith.constant 0 : index
    %c0_8 = arith.constant 0 : index
    %5 = vector.load %arg4[%c0_5, %c0_6, %c0_7, %c0_8] : memref<1x9x8x4xbf16, #tpu.memory_space<vmem>>, vector<1x1x8x4xbf16>
    %6 = vector.shape_cast %5 : vector<1x1x8x4xbf16> to vector<8x4xbf16>
    %7 = vector.extract_strided_slice %4 {offsets = [0, 0], sizes = [4, 384], strides = [1, 1]} : vector<4x512xbf16> to vector<4x384xbf16>
    %cst = arith.constant dense<0.000000e+00> : vector<8x384xf32>
    %8 = tpu.matmul %6, %7, %cst {dimension_numbers = #tpu.dot_dimension_numbers<[1], [0], [0], [1], [0, 0, 1, 1], [], []>} : vector<8x4xbf16>, vector<4x384xbf16>, vector<8x384xf32> -> vector<8x384xf32>
    %c0_9 = arith.constant 0 : index
    %c1 = arith.constant 1 : index
    %c0_10 = arith.constant 0 : index
    %c0_11 = arith.constant 0 : index
    %9 = vector.load %arg4[%c0_9, %c1, %c0_10, %c0_11] : memref<1x9x8x4xbf16, #tpu.memory_space<vmem>>, vector<1x1x8x4xbf16>
    %10 = vector.shape_cast %9 : vector<1x1x8x4xbf16> to vector<8x4xbf16>
    %11 = vector.extract_strided_slice %4 {offsets = [0, 1], sizes = [4, 384], strides = [1, 1]} : vector<4x512xbf16> to vector<4x384xbf16>
    %cst_12 = arith.constant dense<0.000000e+00> : vector<8x384xf32>
    %12 = tpu.matmul %10, %11, %cst_12 {dimension_numbers = #tpu.dot_dimension_numbers<[1], [0], [0], [1], [0, 0, 1, 1], [], []>} : vector<8x4xbf16>, vector<4x384xbf16>, vector<8x384xf32> -> vector<8x384xf32>
    %13 = arith.addf %8, %12 : vector<8x384xf32>
    %c0_13 = arith.constant 0 : index
    %c2 = arith.constant 2 : index
    %c0_14 = arith.constant 0 : index
    %c0_15 = arith.constant 0 : index
    %14 = vector.load %arg4[%c0_13, %c2, %c0_14, %c0_15] : memref<1x9x8x4xbf16, #tpu.memory_space<vmem>>, vector<1x1x8x4xbf16>
    %15 = vector.shape_cast %14 : vector<1x1x8x4xbf16> to vector<8x4xbf16>
    %16 = vector.extract_strided_slice %4 {offsets = [0, 2], sizes = [4, 384], strides = [1, 1]} : vector<4x512xbf16> to vector<4x384xbf16>
    %cst_16 = arith.constant dense<0.000000e+00> : vector<8x384xf32>
    %17 = tpu.matmul %15, %16, %cst_16 {dimension_numbers = #tpu.dot_dimension_numbers<[1], [0], [0], [1], [0, 0, 1, 1], [], []>} : vector<8x4xbf16>, vector<4x384xbf16>, vector<8x384xf32> -> vector<8x384xf32>
    %18 = arith.addf %13, %17 : vector<8x384xf32>
    %c0_17 = arith.constant 0 : index
    %c3 = arith.constant 3 : index
    %c0_18 = arith.constant 0 : index
    %c0_19 = arith.constant 0 : index
    %19 = vector.load %arg4[%c0_17, %c3, %c0_18, %c0_19] : memref<1x9x8x4xbf16, #tpu.memory_space<vmem>>, vector<1x1x8x4xbf16>
    %20 = vector.shape_cast %19 : vector<1x1x8x4xbf16> to vector<8x4xbf16>
    %21 = vector.extract_strided_slice %4 {offsets = [0, 18], sizes = [4, 384], strides = [1, 1]} : vector<4x512xbf16> to vector<4x384xbf16>
    %cst_20 = arith.constant dense<0.000000e+00> : vector<8x384xf32>
    %22 = tpu.matmul %20, %21, %cst_20 {dimension_numbers = #tpu.dot_dimension_numbers<[1], [0], [0], [1], [0, 0, 1, 1], [], []>} : vector<8x4xbf16>, vector<4x384xbf16>, vector<8x384xf32> -> vector<8x384xf32>
    %23 = arith.addf %18, %22 : vector<8x384xf32>
    %c0_21 = arith.constant 0 : index
    %c4 = arith.constant 4 : index
    %c0_22 = arith.constant 0 : index
    %c0_23 = arith.constant 0 : index
    %24 = vector.load %arg4[%c0_21, %c4, %c0_22, %c0_23] : memref<1x9x8x4xbf16, #tpu.memory_space<vmem>>, vector<1x1x8x4xbf16>
    %25 = vector.shape_cast %24 : vector<1x1x8x4xbf16> to vector<8x4xbf16>
    %26 = vector.extract_strided_slice %4 {offsets = [0, 19], sizes = [4, 384], strides = [1, 1]} : vector<4x512xbf16> to vector<4x384xbf16>
    %cst_24 = arith.constant dense<0.000000e+00> : vector<8x384xf32>
    %27 = tpu.matmul %25, %26, %cst_24 {dimension_numbers = #tpu.dot_dimension_numbers<[1], [0], [0], [1], [0, 0, 1, 1], [], []>} : vector<8x4xbf16>, vector<4x384xbf16>, vector<8x384xf32> -> vector<8x384xf32>
    %28 = arith.addf %23, %27 : vector<8x384xf32>
    %c0_25 = arith.constant 0 : index
    %c5 = arith.constant 5 : index
    %c0_26 = arith.constant 0 : index
    %c0_27 = arith.constant 0 : index
    %29 = vector.load %arg4[%c0_25, %c5, %c0_26, %c0_27] : memref<1x9x8x4xbf16, #tpu.memory_space<vmem>>, vector<1x1x8x4xbf16>
    %30 = vector.shape_cast %29 : vector<1x1x8x4xbf16> to vector<8x4xbf16>
    %31 = vector.extract_strided_slice %4 {offsets = [0, 20], sizes = [4, 384], strides = [1, 1]} : vector<4x512xbf16> to vector<4x384xbf16>
    %cst_28 = arith.constant dense<0.000000e+00> : vector<8x384xf32>
    %32 = tpu.matmul %30, %31, %cst_28 {dimension_numbers = #tpu.dot_dimension_numbers<[1], [0], [0], [1], [0, 0, 1, 1], [], []>} : vector<8x4xbf16>, vector<4x384xbf16>, vector<8x384xf32> -> vector<8x384xf32>
    %33 = arith.addf %28, %32 : vector<8x384xf32>
    %c0_29 = arith.constant 0 : index
    %c6 = arith.constant 6 : index
    %c0_30 = arith.constant 0 : index
    %c0_31 = arith.constant 0 : index
    %34 = vector.load %arg4[%c0_29, %c6, %c0_30, %c0_31] : memref<1x9x8x4xbf16, #tpu.memory_space<vmem>>, vector<1x1x8x4xbf16>
    %35 = vector.shape_cast %34 : vector<1x1x8x4xbf16> to vector<8x4xbf16>
    %36 = vector.extract_strided_slice %4 {offsets = [0, 36], sizes = [4, 384], strides = [1, 1]} : vector<4x512xbf16> to vector<4x384xbf16>
    %cst_32 = arith.constant dense<0.000000e+00> : vector<8x384xf32>
    %37 = tpu.matmul %35, %36, %cst_32 {dimension_numbers = #tpu.dot_dimension_numbers<[1], [0], [0], [1], [0, 0, 1, 1], [], []>} : vector<8x4xbf16>, vector<4x384xbf16>, vector<8x384xf32> -> vector<8x384xf32>
    %38 = arith.addf %33, %37 : vector<8x384xf32>
    %c0_33 = arith.constant 0 : index
    %c7 = arith.constant 7 : index
    %c0_34 = arith.constant 0 : index
    %c0_35 = arith.constant 0 : index
    %39 = vector.load %arg4[%c0_33, %c7, %c0_34, %c0_35] : memref<1x9x8x4xbf16, #tpu.memory_space<vmem>>, vector<1x1x8x4xbf16>
    %40 = vector.shape_cast %39 : vector<1x1x8x4xbf16> to vector<8x4xbf16>
    %41 = vector.extract_strided_slice %4 {offsets = [0, 37], sizes = [4, 384], strides = [1, 1]} : vector<4x512xbf16> to vector<4x384xbf16>
    %cst_36 = arith.constant dense<0.000000e+00> : vector<8x384xf32>
    %42 = tpu.matmul %40, %41, %cst_36 {dimension_numbers = #tpu.dot_dimension_numbers<[1], [0], [0], [1], [0, 0, 1, 1], [], []>} : vector<8x4xbf16>, vector<4x384xbf16>, vector<8x384xf32> -> vector<8x384xf32>
    %43 = arith.addf %38, %42 : vector<8x384xf32>
    %c0_37 = arith.constant 0 : index
    %c8 = arith.constant 8 : index
    %c0_38 = arith.constant 0 : index
    %c0_39 = arith.constant 0 : index
    %44 = vector.load %arg4[%c0_37, %c8, %c0_38, %c0_39] : memref<1x9x8x4xbf16, #tpu.memory_space<vmem>>, vector<1x1x8x4xbf16>
    %45 = vector.shape_cast %44 : vector<1x1x8x4xbf16> to vector<8x4xbf16>
    %46 = vector.extract_strided_slice %4 {offsets = [0, 38], sizes = [4, 384], strides = [1, 1]} : vector<4x512xbf16> to vector<4x384xbf16>
    %cst_40 = arith.constant dense<0.000000e+00> : vector<8x384xf32>
    %47 = tpu.matmul %45, %46, %cst_40 {dimension_numbers = #tpu.dot_dimension_numbers<[1], [0], [0], [1], [0, 0, 1, 1], [], []>} : vector<8x4xbf16>, vector<4x384xbf16>, vector<8x384xf32> -> vector<8x384xf32>
    %48 = arith.addf %43, %47 : vector<8x384xf32>
    %c0_41 = arith.constant 0 : index
    %c0_42 = arith.constant 0 : index
    %c0_43 = arith.constant 0 : index
    %49 = vector.load %arg5[%c0_41, %c0_42, %c0_43] : memref<1x8x384xf32, #tpu.memory_space<vmem>>, vector<1x8x384xf32>
    %50 = vector.shape_cast %49 : vector<1x8x384xf32> to vector<8x384xf32>
    %51 = vector.shape_cast %48 : vector<8x384xf32> to vector<1x8x384xf32>
    tpu.vector_store %arg5[%c0_41, %c0_42, %c0_43], %51 {strides = array<i32>} : memref<1x8x384xf32, #tpu.memory_space<vmem>>, vector<1x8x384xf32>,
    return
  }
  func.func @transform_0(%arg0: i32, %arg1: i32) -> (i32, i32, i32) {
    %c0_i32 = arith.constant 0 : i32
    %c0_i32_0 = arith.constant 0 : i32
    return %arg0, %c0_i32, %arg1 : i32, i32, i32
  }
  func.func @transform_1(%arg0: i32, %arg1: i32) -> (i32, i32, i32) {
    %c1_i32 = arith.constant 1 : i32
    %0 = arith.addi %arg1, %c1_i32 : i32
    %c3_i32 = arith.constant 3 : i32
    %1 = arith.muli %0, %c3_i32 : i32
    %c0_i32 = arith.constant 0 : i32
    %c0_i32_0 = arith.constant 0 : i32
    return %arg0, %c0_i32, %1 : i32, i32, i32
  }
  func.func @transform_2(%arg0: i32, %arg1: i32) -> (i32, i32, i32, i32) {
    %c0_i32 = arith.constant 0 : i32
    %c0_i32_0 = arith.constant 0 : i32
    %c0_i32_1 = arith.constant 0 : i32
    %c0_i32_2 = arith.constant 0 : i32
    return %arg0, %c0_i32, %c0_i32_0, %c0_i32_1 : i32, i32, i32, i32
  }
  func.func @transform_3(%arg0: i32, %arg1: i32) -> (i32, i32, i32) {
    %c0_i32 = arith.constant 0 : i32
    %c0_i32_0 = arith.constant 0 : i32
    return %arg0, %c0_i32, %arg1 : i32, i32, i32
  }
}

</mosaic_0001>

<llo_original>
// kernel: dyc_conv2d.2
$region0: #{dyc_conv2d.2}
  #allocation0 [shape = 'u32[]', space=smem, size = 0x4, offset = 0x4, fixed_abs, tag = 'smem constant byte address 0x4 - core index']
  #allocation1 [shape = 'u32[144,128]{1,0:T(1,128)}', space=vmem, size = 0x12000, scoped, tag = 'internal scratch']
  %s0 = inlined_call_operand.vmem [shape: f32[2,4], index: 0, kind: input, shape index: {}]
  %s1 = inlined_call_operand.vmem [shape: f32[4,5], index: 1, kind: input, shape index: {}]
  %s2 = inlined_call_operand.vmem [shape: f32[5,32], index: 2, kind: input, shape index: {}]
  %s3 = inlined_call_operand.vmem [shape: f32[1,32], index: 3, kind: input, shape index: {}]
  %s4 = inlined_call_operand.vmem [shape: f32[2,32], index: 4, kind: output, shape index: {}]
  %s5 = sld [smem:[#allocation0]]
  $region26: #{dyc_conv2d.2} parent=0
    _
  %s7 = ssub.s32 1, %s5
  %s8 = scalar_select 0, %s7, %s5
  // Predicated region
  $region2: #{dyc_conv2d.2} parent=0 // pred_check
    _
  $region3: #{dyc_conv2d.2} parent=0 // pred_check_branch
    %10 = sbr.rel (0) target = $region5
  $region4: #{dyc_conv2d.2} parent=0 // pred_region
    _
  $region5: #{dyc_conv2d.2} parent=0 // pred_fallthru
    _
  // Predicated region
  $region6: #{dyc_conv2d.2} parent=0 // pred_check
    _
  $region7: #{dyc_conv2d.2} parent=0 // pred_check_branch
    %12 = sbr.rel (0) target = $region9
  $region8: #{dyc_conv2d.2} parent=0 // pred_region
    _
  $region9: #{dyc_conv2d.2} parent=0 // pred_fallthru
    _
  // Predicated region
  $region10: #{dyc_conv2d.2} parent=0 // pred_check
    _
  $region11: #{dyc_conv2d.2} parent=0 // pred_check_branch
    %14 = sbr.rel (0) target = $region13
  $region12: #{dyc_conv2d.2} parent=0 // pred_region
    _
  $region13: #{dyc_conv2d.2} parent=0 // pred_fallthru
    _
  // Predicated region
  $region14: #{dyc_conv2d.2} parent=0 // pred_check
    _
  $region15: #{dyc_conv2d.2} parent=0 // pred_check_branch
    %16 = sbr.rel (0) target = $region17
  $region16: #{dyc_conv2d.2} parent=0 // pred_region
    _
  $region17: #{dyc_conv2d.2} parent=0 // pred_fallthru
    _
  %v17 = vld [vmem:[%s0] sm:$0x3]
  %v18 = vld [vmem:[%s1] sm:$0xf]
  %vm19 = vcmask 31744
  %v21 = vsel %vm19, %v17, 0
  %vm23 = vcmask 1043456
  %v25 = vsel %vm23, %v18, 0
  %27 = vmatprep.subr.mxu0 0.0
  %28 = vmatpush1.msra.mxu0 %v25
  %29 = vmatprep.subr.mxu0 0.0
  %30 = vmatpush1.msra.mxu0 0.0
  %31 = vmatprep.subr.mxu0 0.0
  %32 = vmatpush1.msra.mxu0 0.0
  %33 = vmatprep.subr.mxu0 0.0
  %34 = vmatpush1.msra.mxu0 0.0
  %35 = vmatprep.subr.mxu0 0.0
  %36 = vmatpush1.msra.mxu0 0.0
  %37 = vmatprep.subr.mxu0 0.0
  %38 = vmatpush1.msra.mxu0 0.0
  %39 = vmatprep.subr.mxu0 0.0
  %40 = vmatpush1.msra.mxu0 0.0
  %41 = vmatprep.subr.mxu0 0.0
  %42 = vmatpush1.msra.mxu0 0.0
  %43 = vmatprep.subr.mxu0 0.0
  %44 = vmatpush1.msra.mxu0 0.0
  %45 = vmatprep.subr.mxu0 0.0
  %46 = vmatpush1.msra.mxu0 0.0
  %47 = vmatprep.subr.mxu0 0.0
  %48 = vmatpush1.msra.mxu0 0.0
  %49 = vmatprep.subr.mxu0 0.0
  %50 = vmatpush1.msra.mxu0 0.0
  %51 = vmatprep.subr.mxu0 0.0
  %52 = vmatpush1.msra.mxu0 0.0
  %53 = vmatprep.subr.mxu0 0.0
  %54 = vmatpush1.msra.mxu0 0.0
  %55 = vmatprep.subr.mxu0 0.0
  %56 = vmatpush1.msra.mxu0 0.0
  %57 = vmatprep.subr.mxu0 0.0
  %58 = vmatpush1.msra.mxu0 0.0
  %59 = vmatprep.subr.mxu0 0.0
  %60 = vmatpush1.msra.mxu0 0.0
  %61 = vmatprep.subr.mxu0 0.0
  %62 = vmatpush1.msra.mxu0 0.0
  %63 = vmatprep.subr.mxu0 0.0
  %64 = vmatpush1.msra.mxu0 0.0
  %65 = vmatprep.subr.mxu0 0.0
  %66 = vmatpush1.msra.mxu0 0.0
  %67 = vmatprep.subr.mxu0 0.0
  %68 = vmatpush1.msra.mxu0 0.0
  %69 = vmatprep.subr.mxu0 0.0
  %70 = vmatpush1.msra.mxu0 0.0
  %71 = vmatprep.subr.mxu0 0.0
  %72 = vmatpush1.msra.mxu0 0.0
  %73 = vmatprep.subr.mxu0 0.0
  %74 = vmatpush1.msra.mxu0 0.0
  %75 = vmatprep.subr.mxu0 0.0
  %76 = vmatpush1.msra.mxu0 0.0
  %77 = vmatprep.subr.mxu0 0.0
  %78 = vmatpush1.msra.mxu0 0.0
  %79 = vmatprep.subr.mxu0 0.0
  %80 = vmatpush1.msra.mxu0 0.0
  %81 = vmatprep.subr.mxu0 0.0
  %82 = vmatpush1.msra.mxu0 0.0
  %83 = vmatprep.subr.mxu0 0.0
  %84 = vmatpush1.msra.mxu0 0.0
  %85 = vmatprep.subr.mxu0 0.0
  %86 = vmatpush1.msra.mxu0 0.0
  %87 = vmatprep.subr.mxu0 0.0
  %88 = vmatpush1.msra.mxu0 0.0
  %89 = vmatprep.subr.mxu0 0.0
  %90 = vmatpush1.msra.mxu0 0.0
  %91 = vmatprep.mubr.f32.mxu0 0.0
  %92 = vmatmul.mubr.f32.gmra.mrb[0].mxu0 %v21
  %v93 = vpop.f32.mrb[0].mxu0
  %v94 = vadd.f32 0.0, %v93
  %v95 = vpop.f32.mrb[0].mxu0
  %96 = vdwg.mxu0
  %v97 = vmax.f32 %v94, 0.0
  %v98 = vld [vmem:[%s2] sm:$0x1f]
  %v99 = vld [vmem:[%s3] sm:$0x1]
  %v101 = vlaneseq
  %v102 = vshrl.u32 %v101, 7
  %v103 = vsub.s32 0, %v102
  %v104 = vrot.slane %v99, %v103
  %vm106 = vcmask 39936
  %v108 = vsel %vm106, %v97, 0
  %vm110 = vcmask 1044480
  %v112 = vsel %vm110, %v98, 0
  %114 = vmatprep.subr.mxu0 0.0
  %115 = vmatpush1.msra.mxu0 %v112
  %116 = vmatprep.subr.mxu0 0.0
  %117 = vmatpush1.msra.mxu0 0.0
  %118 = vmatprep.subr.mxu0 0.0
  %119 = vmatpush1.msra.mxu0 0.0
  %120 = vmatprep.subr.mxu0 0.0
  %121 = vmatpush1.msra.mxu0 0.0
  %122 = vmatprep.subr.mxu0 0.0
  %123 = vmatpush1.msra.mxu0 0.0
  %124 = vmatprep.subr.mxu0 0.0
  %125 = vmatpush1.msra.mxu0 0.0
  %126 = vmatprep.subr.mxu0 0.0
  %127 = vmatpush1.msra.mxu0 0.0
  %128 = vmatprep.subr.mxu0 0.0
  %129 = vmatpush1.msra.mxu0 0.0
  %130 = vmatprep.subr.mxu0 0.0
  %131 = vmatpush1.msra.mxu0 0.0
  %132 = vmatprep.subr.mxu0 0.0
  %133 = vmatpush1.msra.mxu0 0.0
  %134 = vmatprep.subr.mxu0 0.0
  %135 = vmatpush1.msra.mxu0 0.0
  %136 = vmatprep.subr.mxu0 0.0
  %137 = vmatpush1.msra.mxu0 0.0
  %138 = vmatprep.subr.mxu0 0.0
  %139 = vmatpush1.msra.mxu0 0.0
  %140 = vmatprep.subr.mxu0 0.0
  %141 = vmatpush1.msra.mxu0 0.0
  %142 = vmatprep.subr.mxu0 0.0
  %143 = vmatpush1.msra.mxu0 0.0
  %144 = vmatprep.subr.mxu0 0.0
  %145 = vmatpush1.msra.mxu0 0.0
  %146 = vmatprep.subr.mxu0 0.0
  %147 = vmatpush1.msra.mxu0 0.0
  %148 = vmatprep.subr.mxu0 0.0
  %149 = vmatpush1.msra.mxu0 0.0
  %150 = vmatprep.subr.mxu0 0.0
  %151 = vmatpush1.msra.mxu0 0.0
  %152 = vmatprep.subr.mxu0 0.0
  %153 = vmatpush1.msra.mxu0 0.0
  %154 = vmatprep.subr.mxu0 0.0
  %155 = vmatpush1.msra.mxu0 0.0
  %156 = vmatprep.subr.mxu0 0.0
  %157 = vmatpush1.msra.mxu0 0.0
  %158 = vmatprep.subr.mxu0 0.0
  %159 = vmatpush1.msra.mxu0 0.0
  %160 = vmatprep.subr.mxu0 0.0
  %161 = vmatpush1.msra.mxu0 0.0
  %162 = vmatprep.subr.mxu0 0.0
  %163 = vmatpush1.msra.mxu0 0.0
  %164 = vmatprep.subr.mxu0 0.0
  %165 = vmatpush1.msra.mxu0 0.0
  %166 = vmatprep.subr.mxu0 0.0
  %167 = vmatpush1.msra.mxu0 0.0
  %168 = vmatprep.subr.mxu0 0.0
  %169 = vmatpush1.msra.mxu0 0.0
  %170 = vmatprep.subr.mxu0 0.0
  %171 = vmatpush1.msra.mxu0 0.0
  %172 = vmatprep.subr.mxu0 0.0
  %173 = vmatpush1.msra.mxu0 0.0
  %174 = vmatprep.subr.mxu0 0.0
  %175 = vmatpush1.msra.mxu0 0.0
  %176 = vmatprep.subr.mxu0 0.0
  %177 = vmatpush1.msra.mxu0 0.0
  %178 = vmatprep.mubr.f32.mxu0 0.0
  %179 = vmatmul.mubr.f32.gmra.mrb[0].mxu0 %v108
  %v180 = vpop.f32.mrb[0].mxu0
  %v181 = vadd.f32 %v104, %v180
  %v182 = vpop.f32.mrb[0].mxu0
  %183 = vdwg.mxu0
  %v184 = vmul.f32 %v181, 0.4472136
  %186 = vrot.lane.b32.xlu0 %v184, 120
  %v187 = vpop.permute.xlu0 %186
  %v189 = vmax.f32 %v184, %v187
  %190 = vrot.lane.b32.xlu0 %v184, 112
  %v191 = vpop.permute.xlu0 %190
  %v193 = vmax.f32 %v189, %v191
  %194 = vrot.lane.b32.xlu0 %v184, 104
  %v195 = vpop.permute.xlu0 %194
  %v197 = vmax.f32 %v193, %v195
  %v198 = vsub.f32 %v184, %v197
  %v199 = vmul.f32 %v198, 1.442695
  %v200 = vpow.pop %v199
  %202 = vrot.lane.b32.xlu0 %v197, 8
  %v203 = vpop.permute.xlu0 %202
  %v205 = vsub.f32 %v184, %v203
  %v206 = vmul.f32 %v205, 1.442695
  %v207 = vpow.pop %v206
  %208 = vrot.lane.b32.xlu0 %v197, 16
  %v209 = vpop.permute.xlu0 %208
  %v211 = vsub.f32 %v184, %v209
  %v212 = vmul.f32 %v211, 1.442695
  %v213 = vpow.pop %v212
  %214 = vrot.lane.b32.xlu0 %v197, 24
  %v215 = vpop.permute.xlu0 %214
  %v217 = vsub.f32 %v184, %v215
  %v218 = vmul.f32 %v217, 1.442695
  %v219 = vpow.pop %v218
  %221 = vrot.lane.b32.xlu0 %v207, 120
  %v222 = vpop.permute.xlu0 %221
  %v224 = vadd.f32 %v200, %v222
  %226 = vrot.lane.b32.xlu0 %v213, 112
  %v227 = vpop.permute.xlu0 %226
  %v229 = vadd.f32 %v224, %v227
  %231 = vrot.lane.b32.xlu0 %v219, 104
  %v232 = vpop.permute.xlu0 %231
  %v234 = vadd.f32 %v229, %v232
  %v235 = vrcp.pop %v234
  %v236 = vmul.f32 %v200, %v235
  %238 = vrot.lane.b32.xlu0 %v235, 8
  %v239 = vpop.permute.xlu0 %238
  %v241 = vmul.f32 %v207, %v239
  %242 = vrot.lane.b32.xlu0 %v235, 16
  %v243 = vpop.permute.xlu0 %242
  %v245 = vmul.f32 %v213, %v243
  %246 = vrot.lane.b32.xlu0 %v235, 24
  %v247 = vpop.permute.xlu0 %246
  %v249 = vmul.f32 %v219, %v247
  %vm250 = vcmask 64512
  %v251 = vsel %vm250, %v236, %v241
  %vm252 = vcmask 130048
  %v253 = vsel %vm252, %v251, %v245
  %vm254 = vcmask 195584
  %v255 = vsel %vm254, %v253, %v249
  %vm256 = vcmask 254976
  %257 = vst.msk [vmem:[%s4] sm:$0x3] %vm256, %v255
  // Predicated region
  $region18: #{dyc_conv2d.2} parent=0 // pred_check
    _
  $region19: #{dyc_conv2d.2} parent=0 // pred_check_branch
    %259 = sbr.rel (0) target = $region21
  $region20: #{dyc_conv2d.2} parent=0 // pred_region
    _
  $region21: #{dyc_conv2d.2} parent=0 // pred_fallthru
    _
  // Predicated region
  $region22: #{dyc_conv2d.2} parent=0 // pred_check
    _
  $region23: #{dyc_conv2d.2} parent=0 // pred_check_branch
    %261 = sbr.rel (0) target = $region25
  $region24: #{dyc_conv2d.2} parent=0 // pred_region
    _
  $region25: #{dyc_conv2d.2} parent=0 // pred_fallthru
    _

// kernel: dyc_conv2d.3
$region0: #{dyc_conv2d.3}
  #allocation0 [shape = 'u32[]', space=smem, size = 0x4, offset = 0x4, fixed_abs, tag = 'smem constant byte address 0x4 - core index']
  #allocation1 [shape = 'u32[144,128]{1,0:T(1,128)}', space=vmem, size = 0x12000, scoped, tag = 'internal scratch']
  %s0 = inlined_call_operand.vmem [shape: bf16[2,4,512], index: 0, kind: input, shape index: {}, may-alias: {0,1}]
  %s1 = inlined_call_operand.vmem [shape: bf16[2,4,512], index: 1, kind: input, shape index: {}, may-alias: {0,1}]
  %s2 = inlined_call_operand.vmem [shape: bf16[2,9,8,4], index: 2, kind: input, shape index: {}]
  %s3 = inlined_call_operand.vmem [shape: f32[2,8,384], index: 3, kind: output, shape index: {}]
  %s4 = sld [smem:[#allocation0]]
  $region45: #{dyc_conv2d.3} parent=0
    _
  %s6 = ssub.s32 1, %s4
  %s7 = scalar_select 0, %s6, %s4
  loop: start=0, step=1, limit=4
  $region2: #{dyc_conv2d.3} parent=0 // loop_pre_header
    _
  $region3: #{dyc_conv2d.3} parent=0 // loop_header
    %s9 = sphi 0, %s13
    %p10 = scmp.ge.s32.totalorder %s9, 4
    %s16 = sphi 0, %s28
    %s17 = sphi 0, %s24
    %s18 = sphi 0, %s16
    %s19 = sphi 0, %s17
    %s20 = sphi 0, %s18
    %s21 = sphi 0, %s19
    %s33 = sphi 0, %s35
    %s36 = sphi 0, %s33
    %s37 = sphi 0, %s36
    %s53 = sphi 0, %s37
    %s65 = sphi 0, %s67
    %s68 = sphi 0, %s65
    %s69 = sphi 0, %s68
    %s85 = sphi 0, %s69
    %s91 = sphi 0, %s93
    %s94 = sphi 0, %s91
    %s95 = sphi 0, %s94
    %s111 = sphi 0, %s95
    %s119 = sphi 0, %s121
    %s122 = sphi 0, %s119
    %s123 = sphi 0, %s122
    %s139 = sphi 0, %s123
  $region4: #{dyc_conv2d.3} parent=0 // loop_header_branch
    %12 = sbr.rel (%p10) target = $region8
  $region5: #{dyc_conv2d.3} parent=0 // loop_body
    %s14 = ssub.s32 %s9, 1
    %s15 = ssub.s32 %s9, 2
    %s22 = sadd.s32 1, %s17
    %p23 = scmp.ge.s32.totalorder %s22, 1
    %s24 = scalar_select %p23, 0, %s22
    %s25 = sadd.s32 1, %s16
    %s26 = scalar_select %p23, %s25, %s16
    %p27 = scmp.ge.s32.totalorder %s26, 2
    %s28 = scalar_select %p27, 0, %s26
    %s29 = ssub.s32 %s16, %s28
    %s30 = ssub.s32 %s17, %s24
    %s31 = sor.u32 %s29, %s30
    %p32 = scmp.eq.s32.totalorder %s31, 0
    %s34 = sadd.s32 %s33, 1
    %s35 = scalar_select %p32, %s33, %s34
    %p38 = pneg %p32
    %p39 = scmp.eq.s32.totalorder %s9, 1
    %p40 = por %p38, %p39
    %p41 = scmp.ne.s32.totalorder %s33, %s36
    %p42 = scmp.eq.s32.totalorder %s9, 0
    %p43 = por %p41, %p42
    %p44 = scmp.ne.s32.totalorder %s33, %s36
    %p45 = scmp.eq.s32.totalorder %s14, 1
    %p46 = por %p44, %p45
    %p47 = scmp.ne.s32.totalorder %s36, %s37
    %p48 = scmp.eq.s32.totalorder %s14, 0
    %p49 = por %p47, %p48
    %p50 = scmp.ne.s32.totalorder %s36, %s37
    %p51 = scmp.eq.s32.totalorder %s15, 1
    %p52 = por %p50, %p51
    %p54 = scmp.ne.s32.totalorder %s37, %s53
    %p55 = scmp.eq.s32.totalorder %s15, 0
    %p56 = por %p54, %p55
    %s57 = sadd.s32 %s17, 1
    %s58 = smul.u32 %s57, 3
    %s59 = sadd.s32 %s24, 1
    %s60 = smul.u32 %s59, 3
    %s61 = ssub.s32 %s16, %s28
    %s62 = ssub.s32 %s58, %s60
    %s63 = sor.u32 %s61, %s62
    %p64 = scmp.eq.s32.totalorder %s63, 0
    %s66 = sadd.s32 %s65, 1
    %s67 = scalar_select %p64, %s65, %s66
    %p70 = pneg %p64
    %p71 = scmp.eq.s32.totalorder %s9, 1
    %p72 = por %p70, %p71
    %p73 = scmp.ne.s32.totalorder %s65, %s68
    %p74 = scmp.eq.s32.totalorder %s9, 0
    %p75 = por %p73, %p74
    %p76 = scmp.ne.s32.totalorder %s65, %s68
    %p77 = scmp.eq.s32.totalorder %s14, 1
    %p78 = por %p76, %p77
    %p79 = scmp.ne.s32.totalorder %s68, %s69
    %p80 = scmp.eq.s32.totalorder %s14, 0
    %p81 = por %p79, %p80
    %p82 = scmp.ne.s32.totalorder %s68, %s69
    %p83 = scmp.eq.s32.totalorder %s15, 1
    %p84 = por %p82, %p83
    %p86 = scmp.ne.s32.totalorder %s69, %s85
    %p87 = scmp.eq.s32.totalorder %s15, 0
    %p88 = por %p86, %p87
    %s89 = ssub.s32 %s16, %s28
    %p90 = scmp.eq.s32.totalorder %s89, 0
    %s92 = sadd.s32 %s91, 1
    %s93 = scalar_select %p90, %s91, %s92
    %p96 = pneg %p90
    %p97 = scmp.eq.s32.totalorder %s9, 1
    %p98 = por %p96, %p97
    %p99 = scmp.ne.s32.totalorder %s91, %s94
    %p100 = scmp.eq.s32.totalorder %s9, 0
    %p101 = por %p99, %p100
    %p102 = scmp.ne.s32.totalorder %s91, %s94
    %p103 = scmp.eq.s32.totalorder %s14, 1
    %p104 = por %p102, %p103
    %p105 = scmp.ne.s32.totalorder %s94, %s95
    %p106 = scmp.eq.s32.totalorder %s14, 0
    %p107 = por %p105, %p106
    %p108 = scmp.ne.s32.totalorder %s94, %s95
    %p109 = scmp.eq.s32.totalorder %s15, 1
    %p110 = por %p108, %p109
    %p112 = scmp.ne.s32.totalorder %s95, %s111
    %p113 = scmp.eq.s32.totalorder %s15, 0
    %p114 = por %p112, %p113
    %s115 = ssub.s32 %s16, %s28
    %s116 = ssub.s32 %s17, %s24
    %s117 = sor.u32 %s115, %s116
    %p118 = scmp.eq.s32.totalorder %s117, 0
    %s120 = sadd.s32 %s119, 1
    %s121 = scalar_select %p118, %s119, %s120
    %p124 = pneg %p118
    %p125 = scmp.eq.s32.totalorder %s9, 1
    %p126 = por %p124, %p125
    %p127 = scmp.ne.s32.totalorder %s119, %s122
    %p128 = scmp.eq.s32.totalorder %s9, 0
    %p129 = por %p127, %p128
    %p130 = scmp.ne.s32.totalorder %s119, %s122
    %p131 = scmp.eq.s32.totalorder %s14, 1
    %p132 = por %p130, %p131
    %p133 = scmp.ne.s32.totalorder %s122, %s123
    %p134 = scmp.eq.s32.totalorder %s14, 0
    %p135 = por %p133, %p134
    %p136 = scmp.ne.s32.totalorder %s122, %s123
    %p137 = scmp.eq.s32.totalorder %s15, 1
    %p138 = por %p136, %p137
    %p140 = scmp.ne.s32.totalorder %s123, %s139
    %p141 = scmp.eq.s32.totalorder %s15, 0
    %p142 = por %p140, %p141
    %p143 = scmp.le.s32.totalorder 1, %s9
    %p144 = scmp.lt.s32.totalorder %s9, 3
    %p145 = pnand %p143, %p144
    %p146 = pneg %p145
    // Predicated region
    $region9: #{dyc_conv2d.3} parent=5 // pred_check
      _
    $region10: #{dyc_conv2d.3} parent=5 // pred_check_branch
      %148 = sbr.rel (%p145) target = $region12
    $region11: #{dyc_conv2d.3} parent=5 // pred_region
      %s149 = ssub.s32 %s9, 1
    $region12: #{dyc_conv2d.3} parent=5 // pred_fallthru
      _
    %p150 = scmp.lt.s32.totalorder %s9, 2
    // Predicated region
    $region13: #{dyc_conv2d.3} parent=5 // pred_check
      %p151 = pneg %p150
    $region14: #{dyc_conv2d.3} parent=5 // pred_check_branch
      %153 = sbr.rel (%p151) target = $region16
    $region15: #{dyc_conv2d.3} parent=5 // pred_region
      // Predicated region
      $region17: #{dyc_conv2d.3} parent=15 // pred_check
        %p154 = pneg %p43
      $region18: #{dyc_conv2d.3} parent=15 // pred_check_branch
        %156 = sbr.rel (%p154) target = $region20
      $region19: #{dyc_conv2d.3} parent=15 // pred_region
        %s157 = smul.u32 3, %s17
        %s158 = ssub.s32 4, %s157
        %p159 = scmp.lt.s32.totalorder %s158, 3
        %s160 = scalar_select %p159, %s158, 3
        %s161 = smul.u32 32, %s160
        %p162 = scmp.lt.s32.totalorder %s16, 1
        %s163 = scalar_select %p162, %s16, 1
        %p164 = scmp.lt.s32.totalorder %s157, 3
        %s165 = scalar_select %p164, %s157, 3
        %s166 = smul.addr %s163, 4
        %s167 = sadd.s32 %s165, %s166
        %s168 = smul.addr %s167, 2
        %s169 = scalar_lea.vmem %s0, %s168
        %s170 = smul.u32 3, %s17
        %s171 = ssub.s32 4, %s170
        %p172 = scmp.lt.s32.totalorder %s171, 3
        %s173 = scalar_select %p172, %s171, 3
        %s174 = smul.u32 32, %s173
      $region20: #{dyc_conv2d.3} parent=15 // pred_fallthru
        _
      // Predicated region
      $region21: #{dyc_conv2d.3} parent=15 // pred_check
        %p175 = pneg %p75
      $region22: #{dyc_conv2d.3} parent=15 // pred_check_branch
        %177 = sbr.rel (%p175) target = $region24
      $region23: #{dyc_conv2d.3} parent=15 // pred_region
        %s178 = sadd.s32 %s17, 1
        %s179 = smul.u32 %s178, 3
        %p180 = scmp.lt.s32.totalorder %s16, 1
        %s181 = scalar_select %p180, %s16, 1
        %p182 = scmp.lt.s32.totalorder %s179, 3
        %s183 = scalar_select %p182, %s179, 3
        %s184 = smul.addr %s181, 4
        %s185 = sadd.s32 %s183, %s184
        %s186 = smul.addr %s185, 2
        %s187 = scalar_lea.vmem %s1, %s186
        %s188 = sadd.s32 %s17, 1
        %s189 = smul.u32 %s188, 3
      $region24: #{dyc_conv2d.3} parent=15 // pred_fallthru
        _
      // Predicated region
      $region25: #{dyc_conv2d.3} parent=15 // pred_check
        %p190 = pneg %p101
      $region26: #{dyc_conv2d.3} parent=15 // pred_check_branch
        %192 = sbr.rel (%p190) target = $region28
      $region27: #{dyc_conv2d.3} parent=15 // pred_region
        %p193 = scmp.lt.s32.totalorder %s16, 1
        %s194 = scalar_select %p193, %s16, 1
        %s195 = smul.addr %s194, 9
        %s196 = smul.addr %s195, 4
        %s197 = scalar_lea.vmem %s2, %s196
      $region28: #{dyc_conv2d.3} parent=15 // pred_fallthru
        _
    $region16: #{dyc_conv2d.3} parent=5 // pred_fallthru
      _
    %p198 = scmp.le.s32.totalorder 1, %s9
    %p199 = scmp.lt.s32.totalorder %s9, 3
    %p200 = pnand %p198, %p199
    %p201 = pneg %p200
    // Predicated region
    $region29: #{dyc_conv2d.3} parent=5 // pred_check
      _
    $region30: #{dyc_conv2d.3} parent=5 // pred_check_branch
      %203 = sbr.rel (%p200) target = $region32
    $region31: #{dyc_conv2d.3} parent=5 // pred_region
      %s204 = ssub.s32 %s9, 1
      %s205 = smul.u32 3, %s19
      %s206 = ssub.s32 4, %s205
      %p207 = scmp.lt.s32.totalorder %s206, 3
      %s208 = scalar_select %p207, %s206, 3
      %s209 = smul.u32 32, %s208
      %p210 = scmp.lt.s32.totalorder %s18, 1
      %s211 = scalar_select %p210, %s18, 1
      %p212 = scmp.lt.s32.totalorder %s205, 3
      %s213 = scalar_select %p212, %s205, 3
      %s214 = smul.addr %s211, 4
      %s215 = sadd.s32 %s213, %s214
      %s216 = smul.addr %s215, 2
      %s217 = scalar_lea.vmem %s0, %s216
      %p218 = pneg %p49
      %p219 = pneg %p46
      %s220 = sadd.s32 %s19, 1
      %s221 = smul.u32 %s220, 3
      %p222 = scmp.lt.s32.totalorder %s18, 1
      %s223 = scalar_select %p222, %s18, 1
      %p224 = scmp.lt.s32.totalorder %s221, 3
      %s225 = scalar_select %p224, %s221, 3
      %s226 = smul.addr %s223, 4
      %s227 = sadd.s32 %s225, %s226
      %s228 = smul.addr %s227, 2
      %s229 = scalar_lea.vmem %s1, %s228
      %p230 = pneg %p81
      %p231 = pneg %p78
      %p232 = scmp.lt.s32.totalorder %s18, 1
      %s233 = scalar_select %p232, %s18, 1
      %s234 = smul.addr %s233, 9
      %s235 = smul.addr %s234, 4
      %s236 = scalar_lea.vmem %s2, %s235
      %p237 = pneg %p107
      %p238 = pneg %p104
      %p239 = pneg %p135
      %p240 = pneg %p132
      %s241 = smul.u32 3, %s19
      %p242 = scmp.lt.s32.totalorder %s18, 1
      %s243 = scalar_select %p242, %s18, 1
      %p244 = scmp.lt.s32.totalorder %s241, 2
      %s245 = scalar_select %p244, %s241, 2
      %s246 = smul.addr %s243, 3
      %s247 = sadd.s32 %s245, %s246
      %s248 = smul.addr %s247, 8
      %s249 = scalar_lea.vmem %s3, %s248
      %s250 = smul.u32 3, %s19
      %s251 = ssub.s32 4, %s250
      %p252 = scmp.lt.s32.totalorder %s251, 3
      %s253 = scalar_select %p252, %s251, 3
      %s254 = smul.u32 32, %s253
      %p255 = scmp.lt.s32.totalorder %s18, 1
      %s256 = scalar_select %p255, %s18, 1
      %p257 = scmp.lt.s32.totalorder %s250, 3
      %s258 = scalar_select %p257, %s250, 3
      %s259 = smul.addr %s256, 4
      %s260 = sadd.s32 %s258, %s259
      %s261 = smul.addr %s260, 2
      %s262 = scalar_lea.vmem %s0, %s261
      %s263 = smul.u32 3, %s19
      %s264 = ssub.s32 4, %s263
      %p265 = scmp.lt.s32.totalorder %s264, 3
      %s266 = scalar_select %p265, %s264, 3
      %s267 = smul.u32 32, %s266
      %s268 = sadd.s32 %s19, 1
      %s269 = smul.u32 %s268, 3
      %p270 = scmp.lt.s32.totalorder %s18, 1
      %s271 = scalar_select %p270, %s18, 1
      %p272 = scmp.lt.s32.totalorder %s269, 3
      %s273 = scalar_select %p272, %s269, 3
      %s274 = smul.addr %s271, 4
      %s275 = sadd.s32 %s273, %s274
      %s276 = smul.addr %s275, 2
      %s277 = scalar_lea.vmem %s1, %s276
      %s278 = sadd.s32 %s19, 1
      %s279 = smul.u32 %s278, 3
      %p280 = scmp.lt.s32.totalorder %s18, 1
      %s281 = scalar_select %p280, %s18, 1
      %s282 = smul.addr %s281, 9
      %s283 = smul.addr %s282, 4
      %s284 = scalar_lea.vmem %s2, %s283
      %s285 = smul.u32 3, %s19
      %p286 = scmp.lt.s32.totalorder %s18, 1
      %s287 = scalar_select %p286, %s18, 1
      %p288 = scmp.lt.s32.totalorder %s285, 2
      %s289 = scalar_select %p288, %s285, 2
      %s290 = smul.addr %s287, 3
      %s291 = sadd.s32 %s289, %s290
      %s292 = smul.addr %s291, 8
      %s293 = scalar_lea.vmem %s3, %s292
      %s294 = smul.u32 3, %s19
      %v296 = vld [vmem:[%s262] sm:$0x3f]
      %v297 = vld [vmem:[%s277] sm:$0x3]
      %v299 = vcombine.high %v296, %v296
      %v301 = vunpack.c.l.s4 1983009808
      %v302 = vunpack.c.0.s8 %v301
      %v303 = vlaneseq
      %v304 = vshrl.u32 %v303, 7
      %v305 = vsub.s32 %v302, %v304
      %v306 = vrot.slane %v296, %v305
      %v308 = vunpack.c.l.s4 1983009808
      %v309 = vunpack.c.0.s8 %v308
      %v310 = vlaneseq
      %v311 = vshrl.u32 %v310, 7
      %v312 = vsub.s32 %v309, %v311
      %v313 = vrot.slane %v299, %v312
      %v314 = vcombine.high %v306, %v306
      %v315 = vld [vmem:[%s284] sm:$0xf]
      %s316 = scalar_lea.vmem %s284, 4
      %v317 = vld [vmem:[%s316] sm:$0xf]
      %319 = vrot.lane.b32.xlu0 %v306, 127
      %v320 = vpop.permute.xlu0 %319
      %321 = vrot.lane.b32.xlu0 %v314, 127
      %v322 = vpop.permute.xlu0 %321
      %323 = vrot.lane.b32.xlu0 %v313, 127
      %v324 = vpop.permute.xlu0 %323
      %325 = vrot.lane.b32.xlu0 %v297, 127
      %v326 = vpop.permute.xlu0 %325
      %vm327 = vcmask 1039360
      %v328 = vsel %vm327, %v320, %v322
      %v329 = vsel %vm327, %v322, %v324
      %v330 = vsel %vm327, %v324, %v326
      %vm331 = vcmask 31744
      %v333 = vsel %vm331, %v317, 0
      %vm335 = vcmask 1041408
      %v337 = vsel %vm335, %v328, 0
      %v340 = vsel %vm335, %v329, 0
      %v343 = vsel %vm335, %v330, 0
      %345 = vmatprep.subr.bf16.mxu0 %v340
      %346 = vmatpush1.bf16.msra.mxu0 %v337
      %347 = vmatprep.subr.bf16.mxu0 0
      %348 = vmatpush1.bf16.msra.mxu0 0
      %349 = vmatprep.subr.bf16.mxu0 0
      %350 = vmatpush1.bf16.msra.mxu0 0
      %351 = vmatprep.subr.bf16.mxu0 0
      %352 = vmatpush1.bf16.msra.mxu0 0
      %353 = vmatprep.subr.bf16.mxu0 0
      %354 = vmatpush1.bf16.msra.mxu0 0
      %355 = vmatprep.subr.bf16.mxu0 0
      %356 = vmatpush1.bf16.msra.mxu0 0
      %357 = vmatprep.subr.bf16.mxu0 0
      %358 = vmatpush1.bf16.msra.mxu0 0
      %359 = vmatprep.subr.bf16.mxu0 0
      %360 = vmatpush1.bf16.msra.mxu0 0
      %361 = vmatprep.subr.bf16.mxu0 0
      %362 = vmatpush1.bf16.msra.mxu0 0
      %363 = vmatprep.subr.bf16.mxu0 0
      %364 = vmatpush1.bf16.msra.mxu0 0
      %365 = vmatprep.subr.bf16.mxu0 0
      %366 = vmatpush1.bf16.msra.mxu0 0
      %367 = vmatprep.subr.bf16.mxu0 0
      %368 = vmatpush1.bf16.msra.mxu0 0
      %369 = vmatprep.subr.bf16.mxu0 0
      %370 = vmatpush1.bf16.msra.mxu0 0
      %371 = vmatprep.subr.bf16.mxu0 0
      %372 = vmatpush1.bf16.msra.mxu0 0
      %373 = vmatprep.subr.bf16.mxu0 0
      %374 = vmatpush1.bf16.msra.mxu0 0
      %375 = vmatprep.subr.bf16.mxu0 0
      %376 = vmatpush1.bf16.msra.mxu0 0
      %377 = vmatprep.mubr.bf16.mxu0 0
      %378 = vmatmul.mubr.bf16.gmra.mrb[0].mxu0 %v333
      %v379 = vpop.f32.mrb[0].mxu0
      %v380 = vadd.f32 0.0, %v379
      %v381 = vpop.f32.mrb[0].mxu0
      %v382 = vadd.f32 0.0, %v381
      %v383 = vpop.f32.mrb[0].mxu0
      %v384 = vpop.f32.mrb[0].mxu0
      %385 = vdwg.mxu0
      %386 = vmatprep.subr.bf16.mxu0 0
      %387 = vmatpush1.bf16.msra.mxu0 %v343
      %388 = vmatprep.subr.bf16.mxu0 0
      %389 = vmatpush1.bf16.msra.mxu0 0
      %390 = vmatprep.subr.bf16.mxu0 0
      %391 = vmatpush1.bf16.msra.mxu0 0
      %392 = vmatprep.subr.bf16.mxu0 0
      %393 = vmatpush1.bf16.msra.mxu0 0
      %394 = vmatprep.subr.bf16.mxu0 0
      %395 = vmatpush1.bf16.msra.mxu0 0
      %396 = vmatprep.subr.bf16.mxu0 0
      %397 = vmatpush1.bf16.msra.mxu0 0
      %398 = vmatprep.subr.bf16.mxu0 0
      %399 = vmatpush1.bf16.msra.mxu0 0
      %400 = vmatprep.subr.bf16.mxu0 0
      %401 = vmatpush1.bf16.msra.mxu0 0
      %402 = vmatprep.subr.bf16.mxu0 0
      %403 = vmatpush1.bf16.msra.mxu0 0
      %404 = vmatprep.subr.bf16.mxu0 0
      %405 = vmatpush1.bf16.msra.mxu0 0
      %406 = vmatprep.subr.bf16.mxu0 0
      %407 = vmatpush1.bf16.msra.mxu0 0
      %408 = vmatprep.subr.bf16.mxu0 0
      %409 = vmatpush1.bf16.msra.mxu0 0
      %410 = vmatprep.subr.bf16.mxu0 0
      %411 = vmatpush1.bf16.msra.mxu0 0
      %412 = vmatprep.subr.bf16.mxu0 0
      %413 = vmatpush1.bf16.msra.mxu0 0
      %414 = vmatprep.subr.bf16.mxu0 0
      %415 = vmatpush1.bf16.msra.mxu0 0
      %416 = vmatprep.subr.bf16.mxu0 0
      %417 = vmatpush1.bf16.msra.mxu0 0
      %418 = vmatprep.mubr.bf16.mxu0 0
      %419 = vmatmul.mubr.bf16.gmra.mrb[0].mxu0 %v333
      %v420 = vpop.f32.mrb[0].mxu0
      %v421 = vadd.f32 0.0, %v420
      %v422 = vpop.f32.mrb[0].mxu0
      %v423 = vpop.f32.mrb[0].mxu0
      %v424 = vpop.f32.mrb[0].mxu0
      %425 = vdwg.mxu0
      %v427 = vsel %vm331, %v315, 0
      %v430 = vsel %vm335, %v306, 0
      %v433 = vsel %vm335, %v314, 0
      %v436 = vsel %vm335, %v313, 0
      %438 = vmatprep.subr.bf16.mxu0 %v433
      %439 = vmatpush1.bf16.msra.mxu0 %v430
      %440 = vmatprep.subr.bf16.mxu0 0
      %441 = vmatpush1.bf16.msra.mxu0 0
      %442 = vmatprep.subr.bf16.mxu0 0
      %443 = vmatpush1.bf16.msra.mxu0 0
      %444 = vmatprep.subr.bf16.mxu0 0
      %445 = vmatpush1.bf16.msra.mxu0 0
      %446 = vmatprep.subr.bf16.mxu0 0
      %447 = vmatpush1.bf16.msra.mxu0 0
      %448 = vmatprep.subr.bf16.mxu0 0
      %449 = vmatpush1.bf16.msra.mxu0 0
      %450 = vmatprep.subr.bf16.mxu0 0
      %451 = vmatpush1.bf16.msra.mxu0 0
      %452 = vmatprep.subr.bf16.mxu0 0
      %453 = vmatpush1.bf16.msra.mxu0 0
      %454 = vmatprep.subr.bf16.mxu0 0
      %455 = vmatpush1.bf16.msra.mxu0 0
      %456 = vmatprep.subr.bf16.mxu0 0
      %457 = vmatpush1.bf16.msra.mxu0 0
      %458 = vmatprep.subr.bf16.mxu0 0
      %459 = vmatpush1.bf16.msra.mxu0 0
      %460 = vmatprep.subr.bf16.mxu0 0
      %461 = vmatpush1.bf16.msra.mxu0 0
      %462 = vmatprep.subr.bf16.mxu0 0
      %463 = vmatpush1.bf16.msra.mxu0 0
      %464 = vmatprep.subr.bf16.mxu0 0
      %465 = vmatpush1.bf16.msra.mxu0 0
      %466 = vmatprep.subr.bf16.mxu0 0
      %467 = vmatpush1.bf16.msra.mxu0 0
      %468 = vmatprep.subr.bf16.mxu0 0
      %469 = vmatpush1.bf16.msra.mxu0 0
      %470 = vmatprep.mubr.bf16.mxu0 0
      %471 = vmatmul.mubr.bf16.gmra.mrb[0].mxu0 %v427
      %v472 = vpop.f32.mrb[0].mxu0
      %v473 = vadd.f32 %v380, %v472
      %v474 = vpop.f32.mrb[0].mxu0
      %v475 = vadd.f32 %v382, %v474
      %v476 = vpop.f32.mrb[0].mxu0
      %v477 = vpop.f32.mrb[0].mxu0
      %478 = vdwg.mxu0
      %479 = vmatprep.subr.bf16.mxu0 0
      %480 = vmatpush1.bf16.msra.mxu0 %v436
      %481 = vmatprep.subr.bf16.mxu0 0
      %482 = vmatpush1.bf16.msra.mxu0 0
      %483 = vmatprep.subr.bf16.mxu0 0
      %484 = vmatpush1.bf16.msra.mxu0 0
      %485 = vmatprep.subr.bf16.mxu0 0
      %486 = vmatpush1.bf16.msra.mxu0 0
      %487 = vmatprep.subr.bf16.mxu0 0
      %488 = vmatpush1.bf16.msra.mxu0 0
      %489 = vmatprep.subr.bf16.mxu0 0
      %490 = vmatpush1.bf16.msra.mxu0 0
      %491 = vmatprep.subr.bf16.mxu0 0
      %492 = vmatpush1.bf16.msra.mxu0 0
      %493 = vmatprep.subr.bf16.mxu0 0
      %494 = vmatpush1.bf16.msra.mxu0 0
      %495 = vmatprep.subr.bf16.mxu0 0
      %496 = vmatpush1.bf16.msra.mxu0 0
      %497 = vmatprep.subr.bf16.mxu0 0
      %498 = vmatpush1.bf16.msra.mxu0 0
      %499 = vmatprep.subr.bf16.mxu0 0
      %500 = vmatpush1.bf16.msra.mxu0 0
      %501 = vmatprep.subr.bf16.mxu0 0
      %502 = vmatpush1.bf16.msra.mxu0 0
      %503 = vmatprep.subr.bf16.mxu0 0
      %504 = vmatpush1.bf16.msra.mxu0 0
      %505 = vmatprep.subr.bf16.mxu0 0
      %506 = vmatpush1.bf16.msra.mxu0 0
      %507 = vmatprep.subr.bf16.mxu0 0
      %508 = vmatpush1.bf16.msra.mxu0 0
      %509 = vmatprep.subr.bf16.mxu0 0
      %510 = vmatpush1.bf16.msra.mxu0 0
      %511 = vmatprep.mubr.bf16.mxu0 0
      %512 = vmatmul.mubr.bf16.gmra.mrb[0].mxu0 %v427
      %v513 = vpop.f32.mrb[0].mxu0
      %v514 = vadd.f32 %v421, %v513
      %v515 = vpop.f32.mrb[0].mxu0
      %v516 = vpop.f32.mrb[0].mxu0
      %v517 = vpop.f32.mrb[0].mxu0
      %518 = vdwg.mxu0
      %s519 = scalar_lea.vmem %s284, 8
      %v520 = vld [vmem:[%s519] sm:$0xf]
      %521 = vrot.lane.b32.xlu0 %v306, 126
      %v522 = vpop.permute.xlu0 %521
      %523 = vrot.lane.b32.xlu0 %v314, 126
      %v524 = vpop.permute.xlu0 %523
      %525 = vrot.lane.b32.xlu0 %v313, 126
      %v526 = vpop.permute.xlu0 %525
      %527 = vrot.lane.b32.xlu0 %v297, 126
      %v528 = vpop.permute.xlu0 %527
      %vm529 = vcmask 1031168
      %v530 = vsel %vm529, %v522, %v524
      %v531 = vsel %vm529, %v524, %v526
      %v532 = vsel %vm529, %v526, %v528
      %v534 = vsel %vm331, %v520, 0
      %v537 = vsel %vm335, %v530, 0
      %v540 = vsel %vm335, %v531, 0
      %v543 = vsel %vm335, %v532, 0
      %545 = vmatprep.subr.bf16.mxu0 %v540
      %546 = vmatpush1.bf16.msra.mxu0 %v537
      %547 = vmatprep.subr.bf16.mxu0 0
      %548 = vmatpush1.bf16.msra.mxu0 0
      %549 = vmatprep.subr.bf16.mxu0 0
      %550 = vmatpush1.bf16.msra.mxu0 0
      %551 = vmatprep.subr.bf16.mxu0 0
      %552 = vmatpush1.bf16.msra.mxu0 0
      %553 = vmatprep.subr.bf16.mxu0 0
      %554 = vmatpush1.bf16.msra.mxu0 0
      %555 = vmatprep.subr.bf16.mxu0 0
      %556 = vmatpush1.bf16.msra.mxu0 0
      %557 = vmatprep.subr.bf16.mxu0 0
      %558 = vmatpush1.bf16.msra.mxu0 0
      %559 = vmatprep.subr.bf16.mxu0 0
      %560 = vmatpush1.bf16.msra.mxu0 0
      %561 = vmatprep.subr.bf16.mxu0 0
      %562 = vmatpush1.bf16.msra.mxu0 0
      %563 = vmatprep.subr.bf16.mxu0 0
      %564 = vmatpush1.bf16.msra.mxu0 0
      %565 = vmatprep.subr.bf16.mxu0 0
      %566 = vmatpush1.bf16.msra.mxu0 0
      %567 = vmatprep.subr.bf16.mxu0 0
      %568 = vmatpush1.bf16.msra.mxu0 0
      %569 = vmatprep.subr.bf16.mxu0 0
      %570 = vmatpush1.bf16.msra.mxu0 0
      %571 = vmatprep.subr.bf16.mxu0 0
      %572 = vmatpush1.bf16.msra.mxu0 0
      %573 = vmatprep.subr.bf16.mxu0 0
      %574 = vmatpush1.bf16.msra.mxu0 0
      %575 = vmatprep.subr.bf16.mxu0 0
      %576 = vmatpush1.bf16.msra.mxu0 0
      %577 = vmatprep.mubr.bf16.mxu0 0
      %578 = vmatmul.mubr.bf16.gmra.mrb[0].mxu0 %v534
      %v579 = vpop.f32.mrb[0].mxu0
      %v580 = vadd.f32 0.0, %v579
      %v581 = vpop.f32.mrb[0].mxu0
      %v582 = vadd.f32 0.0, %v581
      %v583 = vpop.f32.mrb[0].mxu0
      %v584 = vpop.f32.mrb[0].mxu0
      %585 = vdwg.mxu0
      %586 = vmatprep.subr.bf16.mxu0 0
      %587 = vmatpush1.bf16.msra.mxu0 %v543
      %588 = vmatprep.subr.bf16.mxu0 0
      %589 = vmatpush1.bf16.msra.mxu0 0
      %590 = vmatprep.subr.bf16.mxu0 0
      %591 = vmatpush1.bf16.msra.mxu0 0
      %592 = vmatprep.subr.bf16.mxu0 0
      %593 = vmatpush1.bf16.msra.mxu0 0
      %594 = vmatprep.subr.bf16.mxu0 0
      %595 = vmatpush1.bf16.msra.mxu0 0
      %596 = vmatprep.subr.bf16.mxu0 0
      %597 = vmatpush1.bf16.msra.mxu0 0
      %598 = vmatprep.subr.bf16.mxu0 0
      %599 = vmatpush1.bf16.msra.mxu0 0
      %600 = vmatprep.subr.bf16.mxu0 0
      %601 = vmatpush1.bf16.msra.mxu0 0
      %602 = vmatprep.subr.bf16.mxu0 0
      %603 = vmatpush1.bf16.msra.mxu0 0
      %604 = vmatprep.subr.bf16.mxu0 0
      %605 = vmatpush1.bf16.msra.mxu0 0
      %606 = vmatprep.subr.bf16.mxu0 0
      %607 = vmatpush1.bf16.msra.mxu0 0
      %608 = vmatprep.subr.bf16.mxu0 0
      %609 = vmatpush1.bf16.msra.mxu0 0
      %610 = vmatprep.subr.bf16.mxu0 0
      %611 = vmatpush1.bf16.msra.mxu0 0
      %612 = vmatprep.subr.bf16.mxu0 0
      %613 = vmatpush1.bf16.msra.mxu0 0
      %614 = vmatprep.subr.bf16.mxu0 0
      %615 = vmatpush1.bf16.msra.mxu0 0
      %616 = vmatprep.subr.bf16.mxu0 0
      %617 = vmatpush1.bf16.msra.mxu0 0
      %618 = vmatprep.mubr.bf16.mxu0 0
      %619 = vmatmul.mubr.bf16.gmra.mrb[0].mxu0 %v534
      %v620 = vpop.f32.mrb[0].mxu0
      %v621 = vadd.f32 0.0, %v620
      %v622 = vpop.f32.mrb[0].mxu0
      %v623 = vpop.f32.mrb[0].mxu0
      %v624 = vpop.f32.mrb[0].mxu0
      %625 = vdwg.mxu0
      %v626 = vadd.f32 %v473, %v580
      %v627 = vadd.f32 %v475, %v582
      %v628 = vadd.f32 %v514, %v621
      %s629 = scalar_lea.vmem %s284, 12
      %v630 = vld [vmem:[%s629] sm:$0xf]
      %631 = vrot.lane.b32.xlu0 %v306, 110
      %v632 = vpop.permute.xlu0 %631
      %633 = vrot.lane.b32.xlu0 %v314, 110
      %v634 = vpop.permute.xlu0 %633
      %635 = vrot.lane.b32.xlu0 %v313, 110
      %v636 = vpop.permute.xlu0 %635
      %637 = vrot.lane.b32.xlu0 %v297, 110
      %v638 = vpop.permute.xlu0 %637
      %vm639 = vcmask 900096
      %v640 = vsel %vm639, %v632, %v634
      %v641 = vsel %vm639, %v634, %v636
      %v642 = vsel %vm639, %v636, %v638
      %v644 = vsel %vm331, %v630, 0
      %v647 = vsel %vm335, %v640, 0
      %v650 = vsel %vm335, %v641, 0
      %v653 = vsel %vm335, %v642, 0
      %655 = vmatprep.subr.bf16.mxu0 %v650
      %656 = vmatpush1.bf16.msra.mxu0 %v647
      %657 = vmatprep.subr.bf16.mxu0 0
      %658 = vmatpush1.bf16.msra.mxu0 0
      %659 = vmatprep.subr.bf16.mxu0 0
      %660 = vmatpush1.bf16.msra.mxu0 0
      %661 = vmatprep.subr.bf16.mxu0 0
      %662 = vmatpush1.bf16.msra.mxu0 0
      %663 = vmatprep.subr.bf16.mxu0 0
      %664 = vmatpush1.bf16.msra.mxu0 0
      %665 = vmatprep.subr.bf16.mxu0 0
      %666 = vmatpush1.bf16.msra.mxu0 0
      %667 = vmatprep.subr.bf16.mxu0 0
      %668 = vmatpush1.bf16.msra.mxu0 0
      %669 = vmatprep.subr.bf16.mxu0 0
      %670 = vmatpush1.bf16.msra.mxu0 0
      %671 = vmatprep.subr.bf16.mxu0 0
      %672 = vmatpush1.bf16.msra.mxu0 0
      %673 = vmatprep.subr.bf16.mxu0 0
      %674 = vmatpush1.bf16.msra.mxu0 0
      %675 = vmatprep.subr.bf16.mxu0 0
      %676 = vmatpush1.bf16.msra.mxu0 0
      %677 = vmatprep.subr.bf16.mxu0 0
      %678 = vmatpush1.bf16.msra.mxu0 0
      %679 = vmatprep.subr.bf16.mxu0 0
      %680 = vmatpush1.bf16.msra.mxu0 0
      %681 = vmatprep.subr.bf16.mxu0 0
      %682 = vmatpush1.bf16.msra.mxu0 0
      %683 = vmatprep.subr.bf16.mxu0 0
      %684 = vmatpush1.bf16.msra.mxu0 0
      %685 = vmatprep.subr.bf16.mxu0 0
      %686 = vmatpush1.bf16.msra.mxu0 0
      %687 = vmatprep.mubr.bf16.mxu0 0
      %688 = vmatmul.mubr.bf16.gmra.mrb[0].mxu0 %v644
      %v689 = vpop.f32.mrb[0].mxu0
      %v690 = vadd.f32 0.0, %v689
      %v691 = vpop.f32.mrb[0].mxu0
      %v692 = vadd.f32 0.0, %v691
      %v693 = vpop.f32.mrb[0].mxu0
      %v694 = vpop.f32.mrb[0].mxu0
      %695 = vdwg.mxu0
      %696 = vmatprep.subr.bf16.mxu0 0
      %697 = vmatpush1.bf16.msra.mxu0 %v653
      %698 = vmatprep.subr.bf16.mxu0 0
      %699 = vmatpush1.bf16.msra.mxu0 0
      %700 = vmatprep.subr.bf16.mxu0 0
      %701 = vmatpush1.bf16.msra.mxu0 0
      %702 = vmatprep.subr.bf16.mxu0 0
      %703 = vmatpush1.bf16.msra.mxu0 0
      %704 = vmatprep.subr.bf16.mxu0 0
      %705 = vmatpush1.bf16.msra.mxu0 0
      %706 = vmatprep.subr.bf16.mxu0 0
      %707 = vmatpush1.bf16.msra.mxu0 0
      %708 = vmatprep.subr.bf16.mxu0 0
      %709 = vmatpush1.bf16.msra.mxu0 0
      %710 = vmatprep.subr.bf16.mxu0 0
      %711 = vmatpush1.bf16.msra.mxu0 0
      %712 = vmatprep.subr.bf16.mxu0 0
      %713 = vmatpush1.bf16.msra.mxu0 0
      %714 = vmatprep.subr.bf16.mxu0 0
      %715 = vmatpush1.bf16.msra.mxu0 0
      %716 = vmatprep.subr.bf16.mxu0 0
      %717 = vmatpush1.bf16.msra.mxu0 0
      %718 = vmatprep.subr.bf16.mxu0 0
      %719 = vmatpush1.bf16.msra.mxu0 0
      %720 = vmatprep.subr.bf16.mxu0 0
      %721 = vmatpush1.bf16.msra.mxu0 0
      %722 = vmatprep.subr.bf16.mxu0 0
      %723 = vmatpush1.bf16.msra.mxu0 0
      %724 = vmatprep.subr.bf16.mxu0 0
      %725 = vmatpush1.bf16.msra.mxu0 0
      %726 = vmatprep.subr.bf16.mxu0 0
      %727 = vmatpush1.bf16.msra.mxu0 0
      %728 = vmatprep.mubr.bf16.mxu0 0
      %729 = vmatmul.mubr.bf16.gmra.mrb[0].mxu0 %v644
      %v730 = vpop.f32.mrb[0].mxu0
      %v731 = vadd.f32 0.0, %v730
      %v732 = vpop.f32.mrb[0].mxu0
      %v733 = vpop.f32.mrb[0].mxu0
      %v734 = vpop.f32.mrb[0].mxu0
      %735 = vdwg.mxu0
      %v736 = vadd.f32 %v626, %v690
      %v737 = vadd.f32 %v627, %v692
      %v738 = vadd.f32 %v628, %v731
      %s739 = scalar_lea.vmem %s284, 16
      %v740 = vld [vmem:[%s739] sm:$0xf]
      %741 = vrot.lane.b32.xlu0 %v306, 109
      %v742 = vpop.permute.xlu0 %741
      %743 = vrot.lane.b32.xlu0 %v314, 109
      %v744 = vpop.permute.xlu0 %743
      %745 = vrot.lane.b32.xlu0 %v313, 109
      %v746 = vpop.permute.xlu0 %745
      %747 = vrot.lane.b32.xlu0 %v297, 109
      %v748 = vpop.permute.xlu0 %747
      %vm749 = vcmask 891904
      %v750 = vsel %vm749, %v742, %v744
      %v751 = vsel %vm749, %v744, %v746
      %v752 = vsel %vm749, %v746, %v748
      %v754 = vsel %vm331, %v740, 0
      %v757 = vsel %vm335, %v750, 0
      %v760 = vsel %vm335, %v751, 0
      %v763 = vsel %vm335, %v752, 0
      %765 = vmatprep.subr.bf16.mxu0 %v760
      %766 = vmatpush1.bf16.msra.mxu0 %v757
      %767 = vmatprep.subr.bf16.mxu0 0
      %768 = vmatpush1.bf16.msra.mxu0 0
      %769 = vmatprep.subr.bf16.mxu0 0
      %770 = vmatpush1.bf16.msra.mxu0 0
      %771 = vmatprep.subr.bf16.mxu0 0
      %772 = vmatpush1.bf16.msra.mxu0 0
      %773 = vmatprep.subr.bf16.mxu0 0
      %774 = vmatpush1.bf16.msra.mxu0 0
      %775 = vmatprep.subr.bf16.mxu0 0
      %776 = vmatpush1.bf16.msra.mxu0 0
      %777 = vmatprep.subr.bf16.mxu0 0
      %778 = vmatpush1.bf16.msra.mxu0 0
      %779 = vmatprep.subr.bf16.mxu0 0
      %780 = vmatpush1.bf16.msra.mxu0 0
      %781 = vmatprep.subr.bf16.mxu0 0
      %782 = vmatpush1.bf16.msra.mxu0 0
      %783 = vmatprep.subr.bf16.mxu0 0
      %784 = vmatpush1.bf16.msra.mxu0 0
      %785 = vmatprep.subr.bf16.mxu0 0
      %786 = vmatpush1.bf16.msra.mxu0 0
      %787 = vmatprep.subr.bf16.mxu0 0
      %788 = vmatpush1.bf16.msra.mxu0 0
      %789 = vmatprep.subr.bf16.mxu0 0
      %790 = vmatpush1.bf16.msra.mxu0 0
      %791 = vmatprep.subr.bf16.mxu0 0
      %792 = vmatpush1.bf16.msra.mxu0 0
      %793 = vmatprep.subr.bf16.mxu0 0
      %794 = vmatpush1.bf16.msra.mxu0 0
      %795 = vmatprep.subr.bf16.mxu0 0
      %796 = vmatpush1.bf16.msra.mxu0 0
      %797 = vmatprep.mubr.bf16.mxu0 0
      %798 = vmatmul.mubr.bf16.gmra.mrb[0].mxu0 %v754
      %v799 = vpop.f32.mrb[0].mxu0
      %v800 = vadd.f32 0.0, %v799
      %v801 = vpop.f32.mrb[0].mxu0
      %v802 = vadd.f32 0.0, %v801
      %v803 = vpop.f32.mrb[0].mxu0
      %v804 = vpop.f32.mrb[0].mxu0
      %805 = vdwg.mxu0
      %806 = vmatprep.subr.bf16.mxu0 0
      %807 = vmatpush1.bf16.msra.mxu0 %v763
      %808 = vmatprep.subr.bf16.mxu0 0
      %809 = vmatpush1.bf16.msra.mxu0 0
      %810 = vmatprep.subr.bf16.mxu0 0
      %811 = vmatpush1.bf16.msra.mxu0 0
      %812 = vmatprep.subr.bf16.mxu0 0
      %813 = vmatpush1.bf16.msra.mxu0 0
      %814 = vmatprep.subr.bf16.mxu0 0
      %815 = vmatpush1.bf16.msra.mxu0 0
      %816 = vmatprep.subr.bf16.mxu0 0
      %817 = vmatpush1.bf16.msra.mxu0 0
      %818 = vmatprep.subr.bf16.mxu0 0
      %819 = vmatpush1.bf16.msra.mxu0 0
      %820 = vmatprep.subr.bf16.mxu0 0
      %821 = vmatpush1.bf16.msra.mxu0 0
      %822 = vmatprep.subr.bf16.mxu0 0
      %823 = vmatpush1.bf16.msra.mxu0 0
      %824 = vmatprep.subr.bf16.mxu0 0
      %825 = vmatpush1.bf16.msra.mxu0 0
      %826 = vmatprep.subr.bf16.mxu0 0
      %827 = vmatpush1.bf16.msra.mxu0 0
      %828 = vmatprep.subr.bf16.mxu0 0
      %829 = vmatpush1.bf16.msra.mxu0 0
      %830 = vmatprep.subr.bf16.mxu0 0
      %831 = vmatpush1.bf16.msra.mxu0 0
      %832 = vmatprep.subr.bf16.mxu0 0
      %833 = vmatpush1.bf16.msra.mxu0 0
      %834 = vmatprep.subr.bf16.mxu0 0
      %835 = vmatpush1.bf16.msra.mxu0 0
      %836 = vmatprep.subr.bf16.mxu0 0
      %837 = vmatpush1.bf16.msra.mxu0 0
      %838 = vmatprep.mubr.bf16.mxu0 0
      %839 = vmatmul.mubr.bf16.gmra.mrb[0].mxu0 %v754
      %v840 = vpop.f32.mrb[0].mxu0
      %v841 = vadd.f32 0.0, %v840
      %v842 = vpop.f32.mrb[0].mxu0
      %v843 = vpop.f32.mrb[0].mxu0
      %v844 = vpop.f32.mrb[0].mxu0
      %845 = vdwg.mxu0
      %v846 = vadd.f32 %v736, %v800
      %v847 = vadd.f32 %v737, %v802
      %v848 = vadd.f32 %v738, %v841
      %s849 = scalar_lea.vmem %s284, 20
      %v850 = vld [vmem:[%s849] sm:$0xf]
      %851 = vrot.lane.b32.xlu0 %v306, 108
      %v852 = vpop.permute.xlu0 %851
      %853 = vrot.lane.b32.xlu0 %v314, 108
      %v854 = vpop.permute.xlu0 %853
      %855 = vrot.lane.b32.xlu0 %v313, 108
      %v856 = vpop.permute.xlu0 %855
      %857 = vrot.lane.b32.xlu0 %v297, 108
      %v858 = vpop.permute.xlu0 %857
      %vm859 = vcmask 883712
      %v860 = vsel %vm859, %v852, %v854
      %v861 = vsel %vm859, %v854, %v856
      %v862 = vsel %vm859, %v856, %v858
      %v864 = vsel %vm331, %v850, 0
      %v867 = vsel %vm335, %v860, 0
      %v870 = vsel %vm335, %v861, 0
      %v873 = vsel %vm335, %v862, 0
      %875 = vmatprep.subr.bf16.mxu0 %v870
      %876 = vmatpush1.bf16.msra.mxu0 %v867
      %877 = vmatprep.subr.bf16.mxu0 0
      %878 = vmatpush1.bf16.msra.mxu0 0
      %879 = vmatprep.subr.bf16.mxu0 0
      %880 = vmatpush1.bf16.msra.mxu0 0
      %881 = vmatprep.subr.bf16.mxu0 0
      %882 = vmatpush1.bf16.msra.mxu0 0
      %883 = vmatprep.subr.bf16.mxu0 0
      %884 = vmatpush1.bf16.msra.mxu0 0
      %885 = vmatprep.subr.bf16.mxu0 0
      %886 = vmatpush1.bf16.msra.mxu0 0
      %887 = vmatprep.subr.bf16.mxu0 0
      %888 = vmatpush1.bf16.msra.mxu0 0
      %889 = vmatprep.subr.bf16.mxu0 0
      %890 = vmatpush1.bf16.msra.mxu0 0
      %891 = vmatprep.subr.bf16.mxu0 0
      %892 = vmatpush1.bf16.msra.mxu0 0
      %893 = vmatprep.subr.bf16.mxu0 0
      %894 = vmatpush1.bf16.msra.mxu0 0
      %895 = vmatprep.subr.bf16.mxu0 0
      %896 = vmatpush1.bf16.msra.mxu0 0
      %897 = vmatprep.subr.bf16.mxu0 0
      %898 = vmatpush1.bf16.msra.mxu0 0
      %899 = vmatprep.subr.bf16.mxu0 0
      %900 = vmatpush1.bf16.msra.mxu0 0
      %901 = vmatprep.subr.bf16.mxu0 0
      %902 = vmatpush1.bf16.msra.mxu0 0
      %903 = vmatprep.subr.bf16.mxu0 0
      %904 = vmatpush1.bf16.msra.mxu0 0
      %905 = vmatprep.subr.bf16.mxu0 0
      %906 = vmatpush1.bf16.msra.mxu0 0
      %907 = vmatprep.mubr.bf16.mxu0 0
      %908 = vmatmul.mubr.bf16.gmra.mrb[0].mxu0 %v864
      %v909 = vpop.f32.mrb[0].mxu0
      %v910 = vadd.f32 0.0, %v909
      %v911 = vpop.f32.mrb[0].mxu0
      %v912 = vadd.f32 0.0, %v911
      %v913 = vpop.f32.mrb[0].mxu0
      %v914 = vpop.f32.mrb[0].mxu0
      %915 = vdwg.mxu0
      %916 = vmatprep.subr.bf16.mxu0 0
      %917 = vmatpush1.bf16.msra.mxu0 %v873
      %918 = vmatprep.subr.bf16.mxu0 0
      %919 = vmatpush1.bf16.msra.mxu0 0
      %920 = vmatprep.subr.bf16.mxu0 0
      %921 = vmatpush1.bf16.msra.mxu0 0
      %922 = vmatprep.subr.bf16.mxu0 0
      %923 = vmatpush1.bf16.msra.mxu0 0
      %924 = vmatprep.subr.bf16.mxu0 0
      %925 = vmatpush1.bf16.msra.mxu0 0
      %926 = vmatprep.subr.bf16.mxu0 0
      %927 = vmatpush1.bf16.msra.mxu0 0
      %928 = vmatprep.subr.bf16.mxu0 0
      %929 = vmatpush1.bf16.msra.mxu0 0
      %930 = vmatprep.subr.bf16.mxu0 0
      %931 = vmatpush1.bf16.msra.mxu0 0
      %932 = vmatprep.subr.bf16.mxu0 0
      %933 = vmatpush1.bf16.msra.mxu0 0
      %934 = vmatprep.subr.bf16.mxu0 0
      %935 = vmatpush1.bf16.msra.mxu0 0
      %936 = vmatprep.subr.bf16.mxu0 0
      %937 = vmatpush1.bf16.msra.mxu0 0
      %938 = vmatprep.subr.bf16.mxu0 0
      %939 = vmatpush1.bf16.msra.mxu0 0
      %940 = vmatprep.subr.bf16.mxu0 0
      %941 = vmatpush1.bf16.msra.mxu0 0
      %942 = vmatprep.subr.bf16.mxu0 0
      %943 = vmatpush1.bf16.msra.mxu0 0
      %944 = vmatprep.subr.bf16.mxu0 0
      %945 = vmatpush1.bf16.msra.mxu0 0
      %946 = vmatprep.subr.bf16.mxu0 0
      %947 = vmatpush1.bf16.msra.mxu0 0
      %948 = vmatprep.mubr.bf16.mxu0 0
      %949 = vmatmul.mubr.bf16.gmra.mrb[0].mxu0 %v864
      %v950 = vpop.f32.mrb[0].mxu0
      %v951 = vadd.f32 0.0, %v950
      %v952 = vpop.f32.mrb[0].mxu0
      %v953 = vpop.f32.mrb[0].mxu0
      %v954 = vpop.f32.mrb[0].mxu0
      %955 = vdwg.mxu0
      %v956 = vadd.f32 %v846, %v910
      %v957 = vadd.f32 %v847, %v912
      %v958 = vadd.f32 %v848, %v951
      %s959 = scalar_lea.vmem %s284, 24
      %v960 = vld [vmem:[%s959] sm:$0xf]
      %961 = vrot.lane.b32.xlu0 %v306, 92
      %v962 = vpop.permute.xlu0 %961
      %963 = vrot.lane.b32.xlu0 %v314, 92
      %v964 = vpop.permute.xlu0 %963
      %965 = vrot.lane.b32.xlu0 %v313, 92
      %v966 = vpop.permute.xlu0 %965
      %967 = vrot.lane.b32.xlu0 %v297, 92
      %v968 = vpop.permute.xlu0 %967
      %vm969 = vcmask 752640
      %v970 = vsel %vm969, %v962, %v964
      %v971 = vsel %vm969, %v964, %v966
      %v972 = vsel %vm969, %v966, %v968
      %v974 = vsel %vm331, %v960, 0
      %v977 = vsel %vm335, %v970, 0
      %v980 = vsel %vm335, %v971, 0
      %v983 = vsel %vm335, %v972, 0
      %985 = vmatprep.subr.bf16.mxu0 %v980
      %986 = vmatpush1.bf16.msra.mxu0 %v977
      %987 = vmatprep.subr.bf16.mxu0 0
      %988 = vmatpush1.bf16.msra.mxu0 0
      %989 = vmatprep.subr.bf16.mxu0 0
      %990 = vmatpush1.bf16.msra.mxu0 0
      %991 = vmatprep.subr.bf16.mxu0 0
      %992 = vmatpush1.bf16.msra.mxu0 0
      %993 = vmatprep.subr.bf16.mxu0 0
      %994 = vmatpush1.bf16.msra.mxu0 0
      %995 = vmatprep.subr.bf16.mxu0 0
      %996 = vmatpush1.bf16.msra.mxu0 0
      %997 = vmatprep.subr.bf16.mxu0 0
      %998 = vmatpush1.bf16.msra.mxu0 0
      %999 = vmatprep.subr.bf16.mxu0 0
      %1000 = vmatpush1.bf16.msra.mxu0 0
      %1001 = vmatprep.subr.bf16.mxu0 0
      %1002 = vmatpush1.bf16.msra.mxu0 0
      %1003 = vmatprep.subr.bf16.mxu0 0
      %1004 = vmatpush1.bf16.msra.mxu0 0
      %1005 = vmatprep.subr.bf16.mxu0 0
      %1006 = vmatpush1.bf16.msra.mxu0 0
      %1007 = vmatprep.subr.bf16.mxu0 0
      %1008 = vmatpush1.bf16.msra.mxu0 0
      %1009 = vmatprep.subr.bf16.mxu0 0
      %1010 = vmatpush1.bf16.msra.mxu0 0
      %1011 = vmatprep.subr.bf16.mxu0 0
      %1012 = vmatpush1.bf16.msra.mxu0 0
      %1013 = vmatprep.subr.bf16.mxu0 0
      %1014 = vmatpush1.bf16.msra.mxu0 0
      %1015 = vmatprep.subr.bf16.mxu0 0
      %1016 = vmatpush1.bf16.msra.mxu0 0
      %1017 = vmatprep.mubr.bf16.mxu0 0
      %1018 = vmatmul.mubr.bf16.gmra.mrb[0].mxu0 %v974
      %v1019 = vpop.f32.mrb[0].mxu0
      %v1020 = vadd.f32 0.0, %v1019
      %v1021 = vpop.f32.mrb[0].mxu0
      %v1022 = vadd.f32 0.0, %v1021
      %v1023 = vpop.f32.mrb[0].mxu0
      %v1024 = vpop.f32.mrb[0].mxu0
      %1025 = vdwg.mxu0
      %1026 = vmatprep.subr.bf16.mxu0 0
      %1027 = vmatpush1.bf16.msra.mxu0 %v983
      %1028 = vmatprep.subr.bf16.mxu0 0
      %1029 = vmatpush1.bf16.msra.mxu0 0
      %1030 = vmatprep.subr.bf16.mxu0 0
      %1031 = vmatpush1.bf16.msra.mxu0 0
      %1032 = vmatprep.subr.bf16.mxu0 0
      %1033 = vmatpush1.bf16.msra.mxu0 0
      %1034 = vmatprep.subr.bf16.mxu0 0
      %1035 = vmatpush1.bf16.msra.mxu0 0
      %1036 = vmatprep.subr.bf16.mxu0 0
      %1037 = vmatpush1.bf16.msra.mxu0 0
      %1038 = vmatprep.subr.bf16.mxu0 0
      %1039 = vmatpush1.bf16.msra.mxu0 0
      %1040 = vmatprep.subr.bf16.mxu0 0
      %1041 = vmatpush1.bf16.msra.mxu0 0
      %1042 = vmatprep.subr.bf16.mxu0 0
      %1043 = vmatpush1.bf16.msra.mxu0 0
      %1044 = vmatprep.subr.bf16.mxu0 0
      %1045 = vmatpush1.bf16.msra.mxu0 0
      %1046 = vmatprep.subr.bf16.mxu0 0
      %1047 = vmatpush1.bf16.msra.mxu0 0
      %1048 = vmatprep.subr.bf16.mxu0 0
      %1049 = vmatpush1.bf16.msra.mxu0 0
      %1050 = vmatprep.subr.bf16.mxu0 0
      %1051 = vmatpush1.bf16.msra.mxu0 0
      %1052 = vmatprep.subr.bf16.mxu0 0
      %1053 = vmatpush1.bf16.msra.mxu0 0
      %1054 = vmatprep.subr.bf16.mxu0 0
      %1055 = vmatpush1.bf16.msra.mxu0 0
      %1056 = vmatprep.subr.bf16.mxu0 0
      %1057 = vmatpush1.bf16.msra.mxu0 0
      %1058 = vmatprep.mubr.bf16.mxu0 0
      %1059 = vmatmul.mubr.bf16.gmra.mrb[0].mxu0 %v974
      %v1060 = vpop.f32.mrb[0].mxu0
      %v1061 = vadd.f32 0.0, %v1060
      %v1062 = vpop.f32.mrb[0].mxu0
      %v1063 = vpop.f32.mrb[0].mxu0
      %v1064 = vpop.f32.mrb[0].mxu0
      %1065 = vdwg.mxu0
      %v1066 = vadd.f32 %v956, %v1020
      %v1067 = vadd.f32 %v957, %v1022
      %v1068 = vadd.f32 %v958, %v1061
      %s1069 = scalar_lea.vmem %s284, 28
      %v1070 = vld [vmem:[%s1069] sm:$0xf]
      %1071 = vrot.lane.b32.xlu0 %v306, 91
      %v1072 = vpop.permute.xlu0 %1071
      %1073 = vrot.lane.b32.xlu0 %v314, 91
      %v1074 = vpop.permute.xlu0 %1073
      %1075 = vrot.lane.b32.xlu0 %v313, 91
      %v1076 = vpop.permute.xlu0 %1075
      %1077 = vrot.lane.b32.xlu0 %v297, 91
      %v1078 = vpop.permute.xlu0 %1077
      %vm1079 = vcmask 744448
      %v1080 = vsel %vm1079, %v1072, %v1074
      %v1081 = vsel %vm1079, %v1074, %v1076
      %v1082 = vsel %vm1079, %v1076, %v1078
      %v1084 = vsel %vm331, %v1070, 0
      %v1087 = vsel %vm335, %v1080, 0
      %v1090 = vsel %vm335, %v1081, 0
      %v1093 = vsel %vm335, %v1082, 0
      %1095 = vmatprep.subr.bf16.mxu0 %v1090
      %1096 = vmatpush1.bf16.msra.mxu0 %v1087
      %1097 = vmatprep.subr.bf16.mxu0 0
      %1098 = vmatpush1.bf16.msra.mxu0 0
      %1099 = vmatprep.subr.bf16.mxu0 0
      %1100 = vmatpush1.bf16.msra.mxu0 0
      %1101 = vmatprep.subr.bf16.mxu0 0
      %1102 = vmatpush1.bf16.msra.mxu0 0
      %1103 = vmatprep.subr.bf16.mxu0 0
      %1104 = vmatpush1.bf16.msra.mxu0 0
      %1105 = vmatprep.subr.bf16.mxu0 0
      %1106 = vmatpush1.bf16.msra.mxu0 0
      %1107 = vmatprep.subr.bf16.mxu0 0
      %1108 = vmatpush1.bf16.msra.mxu0 0
      %1109 = vmatprep.subr.bf16.mxu0 0
      %1110 = vmatpush1.bf16.msra.mxu0 0
      %1111 = vmatprep.subr.bf16.mxu0 0
      %1112 = vmatpush1.bf16.msra.mxu0 0
      %1113 = vmatprep.subr.bf16.mxu0 0
      %1114 = vmatpush1.bf16.msra.mxu0 0
      %1115 = vmatprep.subr.bf16.mxu0 0
      %1116 = vmatpush1.bf16.msra.mxu0 0
      %1117 = vmatprep.subr.bf16.mxu0 0
      %1118 = vmatpush1.bf16.msra.mxu0 0
      %1119 = vmatprep.subr.bf16.mxu0 0
      %1120 = vmatpush1.bf16.msra.mxu0 0
      %1121 = vmatprep.subr.bf16.mxu0 0
      %1122 = vmatpush1.bf16.msra.mxu0 0
      %1123 = vmatprep.subr.bf16.mxu0 0
      %1124 = vmatpush1.bf16.msra.mxu0 0
      %1125 = vmatprep.subr.bf16.mxu0 0
      %1126 = vmatpush1.bf16.msra.mxu0 0
      %1127 = vmatprep.mubr.bf16.mxu0 0
      %1128 = vmatmul.mubr.bf16.gmra.mrb[0].mxu0 %v1084
      %v1129 = vpop.f32.mrb[0].mxu0
      %v1130 = vadd.f32 0.0, %v1129
      %v1131 = vpop.f32.mrb[0].mxu0
      %v1132 = vadd.f32 0.0, %v1131
      %v1133 = vpop.f32.mrb[0].mxu0
      %v1134 = vpop.f32.mrb[0].mxu0
      %1135 = vdwg.mxu0
      %1136 = vmatprep.subr.bf16.mxu0 0
      %1137 = vmatpush1.bf16.msra.mxu0 %v1093
      %1138 = vmatprep.subr.bf16.mxu0 0
      %1139 = vmatpush1.bf16.msra.mxu0 0
      %1140 = vmatprep.subr.bf16.mxu0 0
      %1141 = vmatpush1.bf16.msra.mxu0 0
      %1142 = vmatprep.subr.bf16.mxu0 0
      %1143 = vmatpush1.bf16.msra.mxu0 0
      %1144 = vmatprep.subr.bf16.mxu0 0
      %1145 = vmatpush1.bf16.msra.mxu0 0
      %1146 = vmatprep.subr.bf16.mxu0 0
      %1147 = vmatpush1.bf16.msra.mxu0 0
      %1148 = vmatprep.subr.bf16.mxu0 0
      %1149 = vmatpush1.bf16.msra.mxu0 0
      %1150 = vmatprep.subr.bf16.mxu0 0
      %1151 = vmatpush1.bf16.msra.mxu0 0
      %1152 = vmatprep.subr.bf16.mxu0 0
      %1153 = vmatpush1.bf16.msra.mxu0 0
      %1154 = vmatprep.subr.bf16.mxu0 0
      %1155 = vmatpush1.bf16.msra.mxu0 0
      %1156 = vmatprep.subr.bf16.mxu0 0
      %1157 = vmatpush1.bf16.msra.mxu0 0
      %1158 = vmatprep.subr.bf16.mxu0 0
      %1159 = vmatpush1.bf16.msra.mxu0 0
      %1160 = vmatprep.subr.bf16.mxu0 0
      %1161 = vmatpush1.bf16.msra.mxu0 0
      %1162 = vmatprep.subr.bf16.mxu0 0
      %1163 = vmatpush1.bf16.msra.mxu0 0
      %1164 = vmatprep.subr.bf16.mxu0 0
      %1165 = vmatpush1.bf16.msra.mxu0 0
      %1166 = vmatprep.subr.bf16.mxu0 0
      %1167 = vmatpush1.bf16.msra.mxu0 0
      %1168 = vmatprep.mubr.bf16.mxu0 0
      %1169 = vmatmul.mubr.bf16.gmra.mrb[0].mxu0 %v1084
      %v1170 = vpop.f32.mrb[0].mxu0
      %v1171 = vadd.f32 0.0, %v1170
      %v1172 = vpop.f32.mrb[0].mxu0
      %v1173 = vpop.f32.mrb[0].mxu0
      %v1174 = vpop.f32.mrb[0].mxu0
      %1175 = vdwg.mxu0
      %v1176 = vadd.f32 %v1066, %v1130
      %v1177 = vadd.f32 %v1067, %v1132
      %v1178 = vadd.f32 %v1068, %v1171
      %s1179 = scalar_lea.vmem %s284, 32
      %v1180 = vld [vmem:[%s1179] sm:$0xf]
      %1181 = vrot.lane.b32.xlu0 %v306, 90
      %v1182 = vpop.permute.xlu0 %1181
      %1183 = vrot.lane.b32.xlu0 %v314, 90
      %v1184 = vpop.permute.xlu0 %1183
      %1185 = vrot.lane.b32.xlu0 %v313, 90
      %v1186 = vpop.permute.xlu0 %1185
      %1187 = vrot.lane.b32.xlu0 %v297, 90
      %v1188 = vpop.permute.xlu0 %1187
      %vm1189 = vcmask 736256
      %v1190 = vsel %vm1189, %v1182, %v1184
      %v1191 = vsel %vm1189, %v1184, %v1186
      %v1192 = vsel %vm1189, %v1186, %v1188
      %v1194 = vsel %vm331, %v1180, 0
      %v1197 = vsel %vm335, %v1190, 0
      %v1200 = vsel %vm335, %v1191, 0
      %v1203 = vsel %vm335, %v1192, 0
      %1205 = vmatprep.subr.bf16.mxu0 %v1200
      %1206 = vmatpush1.bf16.msra.mxu0 %v1197
      %1207 = vmatprep.subr.bf16.mxu0 0
      %1208 = vmatpush1.bf16.msra.mxu0 0
      %1209 = vmatprep.subr.bf16.mxu0 0
      %1210 = vmatpush1.bf16.msra.mxu0 0
      %1211 = vmatprep.subr.bf16.mxu0 0
      %1212 = vmatpush1.bf16.msra.mxu0 0
      %1213 = vmatprep.subr.bf16.mxu0 0
      %1214 = vmatpush1.bf16.msra.mxu0 0
      %1215 = vmatprep.subr.bf16.mxu0 0
      %1216 = vmatpush1.bf16.msra.mxu0 0
      %1217 = vmatprep.subr.bf16.mxu0 0
      %1218 = vmatpush1.bf16.msra.mxu0 0
      %1219 = vmatprep.subr.bf16.mxu0 0
      %1220 = vmatpush1.bf16.msra.mxu0 0
      %1221 = vmatprep.subr.bf16.mxu0 0
      %1222 = vmatpush1.bf16.msra.mxu0 0
      %1223 = vmatprep.subr.bf16.mxu0 0
      %1224 = vmatpush1.bf16.msra.mxu0 0
      %1225 = vmatprep.subr.bf16.mxu0 0
      %1226 = vmatpush1.bf16.msra.mxu0 0
      %1227 = vmatprep.subr.bf16.mxu0 0
      %1228 = vmatpush1.bf16.msra.mxu0 0
      %1229 = vmatprep.subr.bf16.mxu0 0
      %1230 = vmatpush1.bf16.msra.mxu0 0
      %1231 = vmatprep.subr.bf16.mxu0 0
      %1232 = vmatpush1.bf16.msra.mxu0 0
      %1233 = vmatprep.subr.bf16.mxu0 0
      %1234 = vmatpush1.bf16.msra.mxu0 0
      %1235 = vmatprep.subr.bf16.mxu0 0
      %1236 = vmatpush1.bf16.msra.mxu0 0
      %1237 = vmatprep.mubr.bf16.mxu0 0
      %1238 = vmatmul.mubr.bf16.gmra.mrb[0].mxu0 %v1194
      %v1239 = vpop.f32.mrb[0].mxu0
      %v1240 = vadd.f32 0.0, %v1239
      %v1241 = vpop.f32.mrb[0].mxu0
      %v1242 = vadd.f32 0.0, %v1241
      %v1243 = vpop.f32.mrb[0].mxu0
      %v1244 = vpop.f32.mrb[0].mxu0
      %1245 = vdwg.mxu0
      %1246 = vmatprep.subr.bf16.mxu0 0
      %1247 = vmatpush1.bf16.msra.mxu0 %v1203
      %1248 = vmatprep.subr.bf16.mxu0 0
      %1249 = vmatpush1.bf16.msra.mxu0 0
      %1250 = vmatprep.subr.bf16.mxu0 0
      %1251 = vmatpush1.bf16.msra.mxu0 0
      %1252 = vmatprep.subr.bf16.mxu0 0
      %1253 = vmatpush1.bf16.msra.mxu0 0
      %1254 = vmatprep.subr.bf16.mxu0 0
      %1255 = vmatpush1.bf16.msra.mxu0 0
      %1256 = vmatprep.subr.bf16.mxu0 0
      %1257 = vmatpush1.bf16.msra.mxu0 0
      %1258 = vmatprep.subr.bf16.mxu0 0
      %1259 = vmatpush1.bf16.msra.mxu0 0
      %1260 = vmatprep.subr.bf16.mxu0 0
      %1261 = vmatpush1.bf16.msra.mxu0 0
      %1262 = vmatprep.subr.bf16.mxu0 0
      %1263 = vmatpush1.bf16.msra.mxu0 0
      %1264 = vmatprep.subr.bf16.mxu0 0
      %1265 = vmatpush1.bf16.msra.mxu0 0
      %1266 = vmatprep.subr.bf16.mxu0 0
      %1267 = vmatpush1.bf16.msra.mxu0 0
      %1268 = vmatprep.subr.bf16.mxu0 0
      %1269 = vmatpush1.bf16.msra.mxu0 0
      %1270 = vmatprep.subr.bf16.mxu0 0
      %1271 = vmatpush1.bf16.msra.mxu0 0
      %1272 = vmatprep.subr.bf16.mxu0 0
      %1273 = vmatpush1.bf16.msra.mxu0 0
      %1274 = vmatprep.subr.bf16.mxu0 0
      %1275 = vmatpush1.bf16.msra.mxu0 0
      %1276 = vmatprep.subr.bf16.mxu0 0
      %1277 = vmatpush1.bf16.msra.mxu0 0
      %1278 = vmatprep.mubr.bf16.mxu0 0
      %1279 = vmatmul.mubr.bf16.gmra.mrb[0].mxu0 %v1194
      %v1280 = vpop.f32.mrb[0].mxu0
      %v1281 = vadd.f32 0.0, %v1280
      %v1282 = vpop.f32.mrb[0].mxu0
      %v1283 = vpop.f32.mrb[0].mxu0
      %v1284 = vpop.f32.mrb[0].mxu0
      %1285 = vdwg.mxu0
      %v1286 = vadd.f32 %v1176, %v1240
      %v1287 = vadd.f32 %v1177, %v1242
      %v1288 = vadd.f32 %v1178, %v1281
      %1289 = vst [vmem:[%s293] sm:$0xff] %v1286
      %1290 = vst [vmem:[%s293 + $0x8] sm:$0xff] %v1287
      %1291 = vst [vmem:[%s293 + $0x10] sm:$0xff] %v1288
      %s1292 = smul.u32 3, %s19
      %p1293 = scmp.lt.s32.totalorder %s18, 1
      %s1294 = scalar_select %p1293, %s18, 1
      %p1295 = scmp.lt.s32.totalorder %s1292, 2
      %s1296 = scalar_select %p1295, %s1292, 2
      %s1297 = smul.addr %s1294, 3
      %s1298 = sadd.s32 %s1296, %s1297
      %s1299 = smul.addr %s1298, 8
      %s1300 = scalar_lea.vmem %s3, %s1299
      // Predicated region
      $region33: #{dyc_conv2d.3} parent=31 // pred_check
        %p1301 = pneg %p132
      $region34: #{dyc_conv2d.3} parent=31 // pred_check_branch
        %1303 = sbr.rel (%p1301) target = $region36
      $region35: #{dyc_conv2d.3} parent=31 // pred_region
        %s1304 = smul.u32 3, %s19
      $region36: #{dyc_conv2d.3} parent=31 // pred_fallthru
        _
    $region32: #{dyc_conv2d.3} parent=5 // pred_fallthru
      _
    %p1305 = scmp.le.s32.totalorder 2, %s9
    // Predicated region
    $region37: #{dyc_conv2d.3} parent=5 // pred_check
      %p1306 = pneg %p1305
    $region38: #{dyc_conv2d.3} parent=5 // pred_check_branch
      %1308 = sbr.rel (%p1306) target = $region40
    $region39: #{dyc_conv2d.3} parent=5 // pred_region
      %s1309 = ssub.s32 %s9, 2
      // Predicated region
      $region41: #{dyc_conv2d.3} parent=39 // pred_check
        %p1310 = pneg %p138
      $region42: #{dyc_conv2d.3} parent=39 // pred_check_branch
        %1312 = sbr.rel (%p1310) target = $region44
      $region43: #{dyc_conv2d.3} parent=39 // pred_region
        %s1313 = smul.u32 3, %s21
        %p1314 = scmp.lt.s32.totalorder %s20, 1
        %s1315 = scalar_select %p1314, %s20, 1
        %p1316 = scmp.lt.s32.totalorder %s1313, 2
        %s1317 = scalar_select %p1316, %s1313, 2
        %s1318 = smul.addr %s1315, 3
        %s1319 = sadd.s32 %s1317, %s1318
        %s1320 = smul.addr %s1319, 8
        %s1321 = scalar_lea.vmem %s3, %s1320
      $region44: #{dyc_conv2d.3} parent=39 // pred_fallthru
        _
    $region40: #{dyc_conv2d.3} parent=5 // pred_fallthru
      _
  $region6: #{dyc_conv2d.3} parent=0 // loop_footer
    %s13 = sadd.s32 1, %s9
  $region7: #{dyc_conv2d.3} parent=0 // loop_footer_branch
    %8 = sbr.rel target = $region3
  $region8: #{dyc_conv2d.3} parent=0 // loop_exit
    _

</llo_original>
